<compile_context>
chip_gen: v7x
topology: tpu7x:2x2x1
jax: 0.10.0
libtpu: 0.0.40
codegen_flags: <defaults>
</compile_context>

<pallas_src>
import functools

import jax
import jax.numpy as jnp
from jax.experimental import pallas as pl
from jax.experimental.pallas import tpu as pltpu


# --------------------------------------------------------------------------
# Fused kernel: channel-major conv matmul + bias/ReLU -> FC1 as Cout
# accumulated matmuls -> ReLU -> FC2.
# --------------------------------------------------------------------------
def dqn_fused_kernel(patch_ref, wc_ref, bc_ref, wfc_ref, bfc_ref,
                     wout_ref, bout_ref, out_ref):
    cout, p, fc_out = wfc_ref.shape
    bt = out_ref.shape[0]

    # 1) Conv as a single lane-dense MXU matmul: (Cout, kkc) @ (kkc, bt*P).
    conv = jnp.dot(wc_ref[...], patch_ref[...],
                   preferred_element_type=jnp.float32)          # (Cout, bt*P) f32
    conv = jnp.maximum(conv + bc_ref[...], 0.0)                 # bias+ReLU in f32

    # 2) Single small view change: (Cout, bt*P) -> (Cout, bt, P).  Indexing
    #    the leading dim below is free; this replaces the old narrow->wide
    #    (bt*P, Cout) -> (bt, P*Cout) flatten.
    conv3 = conv.reshape(cout, bt, p).astype(jnp.bfloat16)

    # 3) FC1 as Cout accumulated lane-dense matmuls (f32 accumulator).
    hid = jnp.zeros((bt, fc_out), jnp.float32)
    for c in range(cout):                                       # Cout = 8, unrolled
        hid = hid + jnp.dot(conv3[c], wfc_ref[c],
                            preferred_element_type=jnp.float32)
    hid = jnp.maximum(hid + bfc_ref[...], 0.0)                  # bias+ReLU in f32

    # 4) FC2 (tiny).
    out_ref[...] = (jnp.dot(hid.astype(jnp.bfloat16), wout_ref[...],
                            preferred_element_type=jnp.float32)
                    + bout_ref[...])


# --------------------------------------------------------------------------
# One-time parameter re-layout (hoisted out of the per-call path).
# PyTorch layouts in, kernel layouts (bf16 matmul weights, f32 biases) out.
# --------------------------------------------------------------------------
def prepare_params(params_pt, *, kernel_size, H, W):
    wc_pt, bc_pt, wfc_pt, bfc_pt, wout_pt, bout_pt = params_pt
    cout, cin, k, _ = wc_pt.shape
    assert k == kernel_size
    out_h, out_w = H - k + 1, W - k + 1
    p = out_h * out_w
    fc_out = wfc_pt.shape[0]
    n_actions = wout_pt.shape[0]

    # (Cout, Cin, kH, kW) -> (Cout, kH, kW, Cin) -> (Cout, kH*kW*Cin); column
    # r = (kh*k + kw)*Cin + cin matches the wrapper's patch_T row order.
    wc_t = jnp.transpose(wc_pt, (0, 2, 3, 1)).reshape(cout, k * k * cin)
    bc = bc_pt.reshape(cout, 1)
    # PyTorch flatten index of (N, Cout, oh, ow) is c*P + p; pre-shape wfc to
    # (Cout, P, fc_out) so FC1 can run as Cout accumulated matmuls.
    wfc3 = jnp.transpose(wfc_pt.reshape(fc_out, cout, p), (1, 2, 0))
    bfc = bfc_pt.reshape(1, fc_out)
    wout = jnp.transpose(wout_pt, (1, 0))
    bout = bout_pt.reshape(1, n_actions)

    bf16 = jnp.bfloat16
    f32 = jnp.float32
    return (wc_t.astype(bf16), bc.astype(f32), wfc3.astype(bf16),
            bfc.astype(f32), wout.astype(bf16), bout.astype(f32))


# --------------------------------------------------------------------------
# Forward wrapper: transposed (kkc, N*P) bf16 im2col + ONE fused pallas_call.
# --------------------------------------------------------------------------
@functools.partial(jax.jit, static_argnames=("kernel_size", "batch_tile"))
def dqn_forward(x_nchw, prepped, *, kernel_size, batch_tile=None):
    wc_t, bc, wfc3, bfc, wout, bout = prepped
    n, cin, H, W = x_nchw.shape
    k = kernel_size
    out_h, out_w = H - k + 1, W - k + 1
    p = out_h * out_w
    kkc = k * k * cin
    cout = wc_t.shape[0]
    fc_out = wfc3.shape[-1]
    n_actions = wout.shape[-1]

    # Batch tile: <= 128 samples (sized against v7x's 64 MiB VMEM; ~4.5 MiB of
    # VMEM used at bt=128 in bf16).  For n > 32 pick a multiple of 32 (lane
    # tile rule: bt*P must be a multiple of 128 when the batch axis is tiled)
    # so the grid has >= 2 "parallel" steps and shards across v7x's two TCs.
    if batch_tile is None:
        if n <= 32:
            bt = n
        else:
            half = (n + 1) // 2
            bt = min(128, ((half + 31) // 32) * 32)
    else:
        bt = batch_tile
    grid_n = -(-n // bt)
    n_pad = grid_n * bt
    if grid_n > 1:
        assert bt % 8 == 0 and (bt * p) % 128 == 0, (
            f"batch_tile={bt} must keep tiled blocks (8,128)-aligned (P={p})")

    # Glue (outside the kernel): NCHW -> NHWC, bf16, transposed im2col.
    # patch_T row r = (kh*k + kw)*Cin + cin, column j = b*P + (oh*out_w + ow).
    x_nhwc = jnp.transpose(x_nchw, (0, 2, 3, 1)).astype(jnp.bfloat16)
    cols = jnp.stack([x_nhwc[:, kh:kh + out_h, kw:kw + out_w, :]
                      for kh in range(k) for kw in range(k)], axis=0)
    patch_t = jnp.transpose(cols, (0, 4, 1, 2, 3)).reshape(kkc, n * p)
    if n_pad != n:  # zero-pad the tail tile (no undefined data in the kernel)
        patch_t = jnp.pad(patch_t, ((0, 0), (0, (n_pad - n) * p)))

    flops = 2 * n_pad * (p * kkc * cout + p * cout * fc_out + fc_out * n_actions)
    weight_bytes = sum(int(a.size) * a.dtype.itemsize
                       for a in (wc_t, bc, wfc3, bfc, wout, bout))
    bytes_accessed = (int(patch_t.size) * patch_t.dtype.itemsize
                      + weight_bytes + n_pad * n_actions * 4)

    def full_spec(shape):
        return pl.BlockSpec(shape, lambda i, _nd=len(shape): (0,) * _nd)

    out = pl.pallas_call(
        dqn_fused_kernel,
        out_shape=jax.ShapeDtypeStruct((n_pad, n_actions), jnp.float32),
        grid=(grid_n,),
        in_specs=[
            pl.BlockSpec((kkc, bt * p), lambda i: (0, i)),   # lane-dense patch
            full_spec(wc_t.shape), full_spec(bc.shape),
            full_spec(wfc3.shape), full_spec(bfc.shape),
            full_spec(wout.shape), full_spec(bout.shape),
        ],
        out_specs=pl.BlockSpec((bt, n_actions), lambda i: (i, 0)),
        compiler_params=pltpu.CompilerParams(
            dimension_semantics=("parallel",),
            vmem_limit_bytes=48 * 1024 * 1024),   # headroom below v7x's 64 MiB
        cost_estimate=pl.CostEstimate(flops=flops, transcendentals=0,
                                      bytes_accessed=bytes_accessed),
    )(patch_t, wc_t, bc, wfc3, bfc, wout, bout)
    return out[:n] if n_pad != n else out


# --------------------------------------------------------------------------
# Pure-JAX f32 reference (same math as the PyTorch forward) for verification.
# --------------------------------------------------------------------------
def reference_forward(x_nchw, params_pt):
    wc_pt, bc_pt, wfc_pt, bfc_pt, wout_pt, bout_pt = params_pt
    y = jax.lax.conv_general_dilated(
        x_nchw.astype(jnp.float32), wc_pt, window_strides=(1, 1),
        padding="VALID", dimension_numbers=("NCHW", "OIHW", "NCHW"))
    y = jax.nn.relu(y + bc_pt[None, :, None, None])
    y = y.reshape(y.shape[0], -1)                  # torch x.view(N, -1)
    y = jax.nn.relu(y @ wfc_pt.T + bfc_pt)
    return y @ wout_pt.T + bout_pt


# --------------------------------------------------------------------------
# Deterministic parameter init (PyTorch-style uniform(-1/sqrt(fan_in), ...)).
# --------------------------------------------------------------------------
def init_params(key, cin, H, W, kernel_size, conv_out, fc_out, n_actions):
    out_h, out_w = H - kernel_size + 1, W - kernel_size + 1
    fc_in = out_h * out_w * conv_out
    ks = jax.random.split(key, 6)

    def u(k, shape, fan_in):
        b = 1.0 / jnp.sqrt(float(fan_in))
        return jax.random.uniform(k, shape, jnp.float32, -b, b)

    wc_pt = u(ks[0], (conv_out, cin, kernel_size, kernel_size),
              cin * kernel_size * kernel_size)
    bc_pt = u(ks[1], (conv_out,), cin * kernel_size * kernel_size)
    wfc_pt = u(ks[2], (fc_out, fc_in), fc_in)
    bfc_pt = u(ks[3], (fc_out,), fc_in)
    wout_pt = u(ks[4], (n_actions, fc_out), fc_out)
    bout_pt = u(ks[5], (n_actions,), fc_out)
    return (wc_pt, bc_pt, wfc_pt, bfc_pt, wout_pt, bout_pt)


if __name__ == "__main__":
    # env.state_shape = (4, 16, 16), kernel_size=3, conv_out_channels=8,
    # fc_out_features=32, env.n_actions=4, batch=2
    BATCH, CIN, H, W = 2, 4, 16, 16
    KSIZE, CONV_OUT, FC_OUT, N_ACTIONS = 3, 8, 32, 4

    key = jax.random.PRNGKey(0)
    kx, kp, kx2 = jax.random.split(key, 3)
    x = jax.random.normal(kx, (BATCH, CIN, H, W), dtype=jnp.float32)
    params_pt = init_params(kp, CIN, H, W, KSIZE, CONV_OUT, FC_OUT, N_ACTIONS)

    # Weight re-layouts done ONCE (not in the per-call path).
    prepped = prepare_params(params_pt, kernel_size=KSIZE, H=H, W=W)
    prepped = tuple(jax.block_until_ready(a) for a in prepped)

    # Small demo batch (grid = 1).
    out = jax.block_until_ready(dqn_forward(x, prepped, kernel_size=KSIZE))
    ref = jax.block_until_ready(reference_forward(x, params_pt))
    assert out.shape == (BATCH, N_ACTIONS)
    assert jnp.allclose(out, ref, atol=5e-2, rtol=5e-2), (
        f"mismatch (batch=2): max abs diff {jnp.max(jnp.abs(out - ref))}")

    # Replay-sized batch: exercises the tiled grid>=2 "parallel" path (bt=128).
    x2 = jax.random.normal(kx2, (256, CIN, H, W), dtype=jnp.float32)
    out2 = jax.block_until_ready(dqn_forward(x2, prepped, kernel_size=KSIZE))
    ref2 = jax.block_until_ready(reference_forward(x2, params_pt))
    assert out2.shape == (256, N_ACTIONS)
    assert jnp.allclose(out2, ref2, atol=5e-2, rtol=5e-2), (
        f"mismatch (batch=256): max abs diff {jnp.max(jnp.abs(out2 - ref2))}")

    print("KERNEL_OK")
</pallas_src>

<mosaic_0001>
module attributes {stable_mosaic.version = 11 : i64} {
  func.func @dqn_fused_kernel(%arg0: i32, %arg1: memref<36x392xbf16, #tpu.memory_space<vmem>>, %arg2: memref<8x36xbf16, #tpu.memory_space<vmem>>, %arg3: memref<8x1xf32, #tpu.memory_space<vmem>>, %arg4: memref<8x196x32xbf16, #tpu.memory_space<vmem>>, %arg5: memref<1x32xf32, #tpu.memory_space<vmem>>, %arg6: memref<32x4xbf16, #tpu.memory_space<vmem>>, %arg7: memref<1x4xf32, #tpu.memory_space<vmem>>, %arg8: memref<2x4xf32, #tpu.memory_space<vmem>>) attributes {dimension_semantics = [#tpu.dimension_semantics<parallel>], iteration_bounds = array<i64: 1>, scalar_prefetch = 0 : i64, scratch_operands = 0 : i64, tpu.core_type = #tpu.core_type<tc>, window_params = [{transform_indices = @transform_0, window_bounds = array<i64: 36, 392>}, {pipeline_mode = #tpu.pipeline_mode<synchronous>, transform_indices = @transform_1, window_bounds = array<i64: 8, 36>}, {pipeline_mode = #tpu.pipeline_mode<synchronous>, transform_indices = @transform_2, window_bounds = array<i64: 8, 1>}, {pipeline_mode = #tpu.pipeline_mode<synchronous>, transform_indices = @transform_3, window_bounds = array<i64: 8, 196, 32>}, {pipeline_mode = #tpu.pipeline_mode<synchronous>, transform_indices = @transform_4, window_bounds = array<i64: 1, 32>}, {pipeline_mode = #tpu.pipeline_mode<synchronous>, transform_indices = @transform_5, window_bounds = array<i64: 32, 4>}, {pipeline_mode = #tpu.pipeline_mode<synchronous>, transform_indices = @transform_6, window_bounds = array<i64: 1, 4>}, {transform_indices = @transform_7, window_bounds = array<i64: 2, 4>}]} {
    %c0 = arith.constant 0 : index
    %c0_0 = arith.constant 0 : index
    %0 = vector.load %arg2[%c0, %c0_0] : memref<8x36xbf16, #tpu.memory_space<vmem>>, vector<8x36xbf16>
    %c0_1 = arith.constant 0 : index
    %c0_2 = arith.constant 0 : index
    %1 = vector.load %arg1[%c0_1, %c0_2] : memref<36x392xbf16, #tpu.memory_space<vmem>>, vector<36x392xbf16>
    %cst = arith.constant dense<0.000000e+00> : vector<8x392xf32>
    %2 = tpu.matmul %0, %1, %cst {dimension_numbers = #tpu.dot_dimension_numbers<[1], [0], [0], [1], [0, 0, 1, 1], [], []>} : vector<8x36xbf16>, vector<36x392xbf16>, vector<8x392xf32> -> vector<8x392xf32>
    %c0_3 = arith.constant 0 : index
    %c0_4 = arith.constant 0 : index
    %3 = vector.load %arg3[%c0_3, %c0_4] : memref<8x1xf32, #tpu.memory_space<vmem>>, vector<8x1xf32>
    %4 = vector.broadcast %3 : vector<8x1xf32> to vector<8x392xf32>
    %5 = arith.addf %2, %4 : vector<8x392xf32>
    %cst_5 = arith.constant 0.000000e+00 : f32
    %6 = vector.broadcast %cst_5 : f32 to vector<8x392xf32>
    %7 = arith.maximumf %5, %6 : vector<8x392xf32>
    %8 = vector.shape_cast %7 : vector<8x392xf32> to vector<8x2x196xf32>
    %9 = arith.truncf %8 : vector<8x2x196xf32> to vector<8x2x196xbf16>
    %cst_6 = arith.constant 0.000000e+00 : f32
    %10 = vector.broadcast %cst_6 : f32 to vector<2x32xf32>
    %11 = vector.extract_strided_slice %9 {offsets = [0, 0, 0], sizes = [1, 2, 196], strides = [1, 1, 1]} : vector<8x2x196xbf16> to vector<1x2x196xbf16>
    %12 = vector.shape_cast %11 : vector<1x2x196xbf16> to vector<2x196xbf16>
    %c0_7 = arith.constant 0 : index
    %c0_8 = arith.constant 0 : index
    %c0_9 = arith.constant 0 : index
    %13 = vector.load %arg4[%c0_7, %c0_8, %c0_9] : memref<8x196x32xbf16, #tpu.memory_space<vmem>>, vector<1x196x32xbf16>
    %14 = vector.shape_cast %13 : vector<1x196x32xbf16> to vector<196x32xbf16>
    %cst_10 = arith.constant dense<0.000000e+00> : vector<2x32xf32>
    %15 = tpu.matmul %12, %14, %cst_10 {dimension_numbers = #tpu.dot_dimension_numbers<[1], [0], [0], [1], [0, 0, 1, 1], [], []>} : vector<2x196xbf16>, vector<196x32xbf16>, vector<2x32xf32> -> vector<2x32xf32>
    %16 = arith.addf %10, %15 : vector<2x32xf32>
    %17 = vector.extract_strided_slice %9 {offsets = [1, 0, 0], sizes = [1, 2, 196], strides = [1, 1, 1]} : vector<8x2x196xbf16> to vector<1x2x196xbf16>
    %18 = vector.shape_cast %17 : vector<1x2x196xbf16> to vector<2x196xbf16>
    %c1 = arith.constant 1 : index
    %c0_11 = arith.constant 0 : index
    %c0_12 = arith.constant 0 : index
    %19 = vector.load %arg4[%c1, %c0_11, %c0_12] : memref<8x196x32xbf16, #tpu.memory_space<vmem>>, vector<1x196x32xbf16>
    %20 = vector.shape_cast %19 : vector<1x196x32xbf16> to vector<196x32xbf16>
    %cst_13 = arith.constant dense<0.000000e+00> : vector<2x32xf32>
    %21 = tpu.matmul %18, %20, %cst_13 {dimension_numbers = #tpu.dot_dimension_numbers<[1], [0], [0], [1], [0, 0, 1, 1], [], []>} : vector<2x196xbf16>, vector<196x32xbf16>, vector<2x32xf32> -> vector<2x32xf32>
    %22 = arith.addf %16, %21 : vector<2x32xf32>
    %23 = vector.extract_strided_slice %9 {offsets = [2, 0, 0], sizes = [1, 2, 196], strides = [1, 1, 1]} : vector<8x2x196xbf16> to vector<1x2x196xbf16>
    %24 = vector.shape_cast %23 : vector<1x2x196xbf16> to vector<2x196xbf16>
    %c2 = arith.constant 2 : index
    %c0_14 = arith.constant 0 : index
    %c0_15 = arith.constant 0 : index
    %25 = vector.load %arg4[%c2, %c0_14, %c0_15] : memref<8x196x32xbf16, #tpu.memory_space<vmem>>, vector<1x196x32xbf16>
    %26 = vector.shape_cast %25 : vector<1x196x32xbf16> to vector<196x32xbf16>
    %cst_16 = arith.constant dense<0.000000e+00> : vector<2x32xf32>
    %27 = tpu.matmul %24, %26, %cst_16 {dimension_numbers = #tpu.dot_dimension_numbers<[1], [0], [0], [1], [0, 0, 1, 1], [], []>} : vector<2x196xbf16>, vector<196x32xbf16>, vector<2x32xf32> -> vector<2x32xf32>
    %28 = arith.addf %22, %27 : vector<2x32xf32>
    %29 = vector.extract_strided_slice %9 {offsets = [3, 0, 0], sizes = [1, 2, 196], strides = [1, 1, 1]} : vector<8x2x196xbf16> to vector<1x2x196xbf16>
    %30 = vector.shape_cast %29 : vector<1x2x196xbf16> to vector<2x196xbf16>
    %c3 = arith.constant 3 : index
    %c0_17 = arith.constant 0 : index
    %c0_18 = arith.constant 0 : index
    %31 = vector.load %arg4[%c3, %c0_17, %c0_18] : memref<8x196x32xbf16, #tpu.memory_space<vmem>>, vector<1x196x32xbf16>
    %32 = vector.shape_cast %31 : vector<1x196x32xbf16> to vector<196x32xbf16>
    %cst_19 = arith.constant dense<0.000000e+00> : vector<2x32xf32>
    %33 = tpu.matmul %30, %32, %cst_19 {dimension_numbers = #tpu.dot_dimension_numbers<[1], [0], [0], [1], [0, 0, 1, 1], [], []>} : vector<2x196xbf16>, vector<196x32xbf16>, vector<2x32xf32> -> vector<2x32xf32>
    %34 = arith.addf %28, %33 : vector<2x32xf32>
    %35 = vector.extract_strided_slice %9 {offsets = [4, 0, 0], sizes = [1, 2, 196], strides = [1, 1, 1]} : vector<8x2x196xbf16> to vector<1x2x196xbf16>
    %36 = vector.shape_cast %35 : vector<1x2x196xbf16> to vector<2x196xbf16>
    %c4 = arith.constant 4 : index
    %c0_20 = arith.constant 0 : index
    %c0_21 = arith.constant 0 : index
    %37 = vector.load %arg4[%c4, %c0_20, %c0_21] : memref<8x196x32xbf16, #tpu.memory_space<vmem>>, vector<1x196x32xbf16>
    %38 = vector.shape_cast %37 : vector<1x196x32xbf16> to vector<196x32xbf16>
    %cst_22 = arith.constant dense<0.000000e+00> : vector<2x32xf32>
    %39 = tpu.matmul %36, %38, %cst_22 {dimension_numbers = #tpu.dot_dimension_numbers<[1], [0], [0], [1], [0, 0, 1, 1], [], []>} : vector<2x196xbf16>, vector<196x32xbf16>, vector<2x32xf32> -> vector<2x32xf32>
    %40 = arith.addf %34, %39 : vector<2x32xf32>
    %41 = vector.extract_strided_slice %9 {offsets = [5, 0, 0], sizes = [1, 2, 196], strides = [1, 1, 1]} : vector<8x2x196xbf16> to vector<1x2x196xbf16>
    %42 = vector.shape_cast %41 : vector<1x2x196xbf16> to vector<2x196xbf16>
    %c5 = arith.constant 5 : index
    %c0_23 = arith.constant 0 : index
    %c0_24 = arith.constant 0 : index
    %43 = vector.load %arg4[%c5, %c0_23, %c0_24] : memref<8x196x32xbf16, #tpu.memory_space<vmem>>, vector<1x196x32xbf16>
    %44 = vector.shape_cast %43 : vector<1x196x32xbf16> to vector<196x32xbf16>
    %cst_25 = arith.constant dense<0.000000e+00> : vector<2x32xf32>
    %45 = tpu.matmul %42, %44, %cst_25 {dimension_numbers = #tpu.dot_dimension_numbers<[1], [0], [0], [1], [0, 0, 1, 1], [], []>} : vector<2x196xbf16>, vector<196x32xbf16>, vector<2x32xf32> -> vector<2x32xf32>
    %46 = arith.addf %40, %45 : vector<2x32xf32>
    %47 = vector.extract_strided_slice %9 {offsets = [6, 0, 0], sizes = [1, 2, 196], strides = [1, 1, 1]} : vector<8x2x196xbf16> to vector<1x2x196xbf16>
    %48 = vector.shape_cast %47 : vector<1x2x196xbf16> to vector<2x196xbf16>
    %c6 = arith.constant 6 : index
    %c0_26 = arith.constant 0 : index
    %c0_27 = arith.constant 0 : index
    %49 = vector.load %arg4[%c6, %c0_26, %c0_27] : memref<8x196x32xbf16, #tpu.memory_space<vmem>>, vector<1x196x32xbf16>
    %50 = vector.shape_cast %49 : vector<1x196x32xbf16> to vector<196x32xbf16>
    %cst_28 = arith.constant dense<0.000000e+00> : vector<2x32xf32>
    %51 = tpu.matmul %48, %50, %cst_28 {dimension_numbers = #tpu.dot_dimension_numbers<[1], [0], [0], [1], [0, 0, 1, 1], [], []>} : vector<2x196xbf16>, vector<196x32xbf16>, vector<2x32xf32> -> vector<2x32xf32>
    %52 = arith.addf %46, %51 : vector<2x32xf32>
    %53 = vector.extract_strided_slice %9 {offsets = [7, 0, 0], sizes = [1, 2, 196], strides = [1, 1, 1]} : vector<8x2x196xbf16> to vector<1x2x196xbf16>
    %54 = vector.shape_cast %53 : vector<1x2x196xbf16> to vector<2x196xbf16>
    %c7 = arith.constant 7 : index
    %c0_29 = arith.constant 0 : index
    %c0_30 = arith.constant 0 : index
    %55 = vector.load %arg4[%c7, %c0_29, %c0_30] : memref<8x196x32xbf16, #tpu.memory_space<vmem>>, vector<1x196x32xbf16>
    %56 = vector.shape_cast %55 : vector<1x196x32xbf16> to vector<196x32xbf16>
    %cst_31 = arith.constant dense<0.000000e+00> : vector<2x32xf32>
    %57 = tpu.matmul %54, %56, %cst_31 {dimension_numbers = #tpu.dot_dimension_numbers<[1], [0], [0], [1], [0, 0, 1, 1], [], []>} : vector<2x196xbf16>, vector<196x32xbf16>, vector<2x32xf32> -> vector<2x32xf32>
    %58 = arith.addf %52, %57 : vector<2x32xf32>
    %c0_32 = arith.constant 0 : index
    %c0_33 = arith.constant 0 : index
    %59 = vector.load %arg5[%c0_32, %c0_33] : memref<1x32xf32, #tpu.memory_space<vmem>>, vector<1x32xf32>
    %60 = vector.broadcast %59 : vector<1x32xf32> to vector<2x32xf32>
    %61 = arith.addf %58, %60 : vector<2x32xf32>
    %cst_34 = arith.constant 0.000000e+00 : f32
    %62 = vector.broadcast %cst_34 : f32 to vector<2x32xf32>
    %63 = arith.maximumf %61, %62 : vector<2x32xf32>
    %64 = arith.truncf %63 : vector<2x32xf32> to vector<2x32xbf16>
    %c0_35 = arith.constant 0 : index
    %c0_36 = arith.constant 0 : index
    %65 = vector.load %arg6[%c0_35, %c0_36] : memref<32x4xbf16, #tpu.memory_space<vmem>>, vector<32x4xbf16>
    %cst_37 = arith.constant dense<0.000000e+00> : vector<2x4xf32>
    %66 = tpu.matmul %64, %65, %cst_37 {dimension_numbers = #tpu.dot_dimension_numbers<[1], [0], [0], [1], [0, 0, 1, 1], [], []>} : vector<2x32xbf16>, vector<32x4xbf16>, vector<2x4xf32> -> vector<2x4xf32>
    %c0_38 = arith.constant 0 : index
    %c0_39 = arith.constant 0 : index
    %67 = vector.load %arg7[%c0_38, %c0_39] : memref<1x4xf32, #tpu.memory_space<vmem>>, vector<1x4xf32>
    %68 = vector.broadcast %67 : vector<1x4xf32> to vector<2x4xf32>
    %69 = arith.addf %66, %68 : vector<2x4xf32>
    %c0_40 = arith.constant 0 : index
    %c0_41 = arith.constant 0 : index
    %70 = vector.load %arg8[%c0_40, %c0_41] : memref<2x4xf32, #tpu.memory_space<vmem>>, vector<2x4xf32>
    tpu.vector_store %arg8[%c0_40, %c0_41], %69 {strides = array<i32>} : memref<2x4xf32, #tpu.memory_space<vmem>>, vector<2x4xf32>,
    return
  }
  func.func @transform_0(%arg0: i32) -> (i32, i32) {
    %c0_i32 = arith.constant 0 : i32
    %c0_i32_0 = arith.constant 0 : i32
    return %c0_i32, %arg0 : i32, i32
  }
  func.func @transform_1(%arg0: i32) -> (i32, i32) {
    %c0_i32 = arith.constant 0 : i32
    %c0_i32_0 = arith.constant 0 : i32
    %c0_i32_1 = arith.constant 0 : i32
    return %c0_i32, %c0_i32_0 : i32, i32
  }
  func.func @transform_2(%arg0: i32) -> (i32, i32) {
    %c0_i32 = arith.constant 0 : i32
    %c0_i32_0 = arith.constant 0 : i32
    %c0_i32_1 = arith.constant 0 : i32
    return %c0_i32, %c0_i32_0 : i32, i32
  }
  func.func @transform_3(%arg0: i32) -> (i32, i32, i32) {
    %c0_i32 = arith.constant 0 : i32
    %c0_i32_0 = arith.constant 0 : i32
    %c0_i32_1 = arith.constant 0 : i32
    %c0_i32_2 = arith.constant 0 : i32
    return %c0_i32, %c0_i32_0, %c0_i32_1 : i32, i32, i32
  }
  func.func @transform_4(%arg0: i32) -> (i32, i32) {
    %c0_i32 = arith.constant 0 : i32
    %c0_i32_0 = arith.constant 0 : i32
    %c0_i32_1 = arith.constant 0 : i32
    return %c0_i32, %c0_i32_0 : i32, i32
  }
  func.func @transform_5(%arg0: i32) -> (i32, i32) {
    %c0_i32 = arith.constant 0 : i32
    %c0_i32_0 = arith.constant 0 : i32
    %c0_i32_1 = arith.constant 0 : i32
    return %c0_i32, %c0_i32_0 : i32, i32
  }
  func.func @transform_6(%arg0: i32) -> (i32, i32) {
    %c0_i32 = arith.constant 0 : i32
    %c0_i32_0 = arith.constant 0 : i32
    %c0_i32_1 = arith.constant 0 : i32
    return %c0_i32, %c0_i32_0 : i32, i32
  }
  func.func @transform_7(%arg0: i32) -> (i32, i32) {
    %c0_i32 = arith.constant 0 : i32
    %c0_i32_0 = arith.constant 0 : i32
    return %arg0, %c0_i32 : i32, i32
  }
}

</mosaic_0001>

<llo_original>
// kernel: dqn_forward.1
$region0: #{dqn_forward.1}
  #allocation0 [shape = 'u32[]', space=smem, size = 0x4, offset = 0x4, fixed_abs, tag = 'smem constant byte address 0x4 - core index']
  #allocation1 [shape = 'u32[144,128]{1,0:T(1,128)}', space=vmem, size = 0x12000, scoped, tag = 'internal scratch']
  %s0 = inlined_call_operand.vmem [shape: bf16[36,392], index: 0, kind: input, shape index: {}]
  %s1 = inlined_call_operand.vmem [shape: bf16[8,36], index: 1, kind: input, shape index: {}]
  %s2 = inlined_call_operand.vmem [shape: f32[8,1], index: 2, kind: input, shape index: {}]
  %s3 = inlined_call_operand.vmem [shape: bf16[8,196,32], index: 3, kind: input, shape index: {}]
  %s4 = inlined_call_operand.vmem [shape: f32[1,32], index: 4, kind: input, shape index: {}]
  %s5 = inlined_call_operand.vmem [shape: bf16[32,4], index: 5, kind: input, shape index: {}]
  %s6 = inlined_call_operand.vmem [shape: f32[1,4], index: 6, kind: input, shape index: {}]
  %s7 = inlined_call_operand.hbm [shape: f32[2,4], index: 7, kind: output, shape index: {}]
  %s8 = sld [smem:[#allocation0]]
  $region38: #{dqn_forward.1} parent=0
    _
  %s10 = ssub.s32 1, %s8
  %s11 = scalar_select 0, %s10, %s8
  $region1: #{dqn_forward.1} parent=0
    #allocation2 [shape = 'u8[1024]{0}', space=vmem, size = 0x400, scoped, tag = 'output window, operand 0, single buffered']
    #allocation3 [shape = 's32[1]{0}', space=sflag, size = 0x4, scoped, tag = 'scoped memory for dqn_forward.1']
    %12 = vsyncpa [#allocation3], 0
    // Predicated region
    $region2: #{dqn_forward.1} parent=1 // pred_check
      _
    $region3: #{dqn_forward.1} parent=1 // pred_check_branch
      %14 = sbr.rel (0) target = $region5
    $region4: #{dqn_forward.1} parent=1 // pred_region
      _
    $region5: #{dqn_forward.1} parent=1 // pred_fallthru
      _
    // Predicated region
    $region6: #{dqn_forward.1} parent=1 // pred_check
      _
    $region7: #{dqn_forward.1} parent=1 // pred_check_branch
      %16 = sbr.rel (0) target = $region9
    $region8: #{dqn_forward.1} parent=1 // pred_region
      _
    $region9: #{dqn_forward.1} parent=1 // pred_fallthru
      _
    // Predicated region
    $region10: #{dqn_forward.1} parent=1 // pred_check
      _
    $region11: #{dqn_forward.1} parent=1 // pred_check_branch
      %18 = sbr.rel (0) target = $region13
    $region12: #{dqn_forward.1} parent=1 // pred_region
      _
    $region13: #{dqn_forward.1} parent=1 // pred_fallthru
      _
    // Predicated region
    $region14: #{dqn_forward.1} parent=1 // pred_check
      _
    $region15: #{dqn_forward.1} parent=1 // pred_check_branch
      %20 = sbr.rel (0) target = $region17
    $region16: #{dqn_forward.1} parent=1 // pred_region
      _
    $region17: #{dqn_forward.1} parent=1 // pred_fallthru
      _
    // Predicated region
    $region18: #{dqn_forward.1} parent=1 // pred_check
      _
    $region19: #{dqn_forward.1} parent=1 // pred_check_branch
      %22 = sbr.rel (0) target = $region21
    $region20: #{dqn_forward.1} parent=1 // pred_region
      _
    $region21: #{dqn_forward.1} parent=1 // pred_fallthru
      _
    // Predicated region
    $region22: #{dqn_forward.1} parent=1 // pred_check
      _
    $region23: #{dqn_forward.1} parent=1 // pred_check_branch
      %24 = sbr.rel (0) target = $region25
    $region24: #{dqn_forward.1} parent=1 // pred_region
      _
    $region25: #{dqn_forward.1} parent=1 // pred_fallthru
      _
    // Predicated region
    $region26: #{dqn_forward.1} parent=1 // pred_check
      _
    $region27: #{dqn_forward.1} parent=1 // pred_check_branch
      %26 = sbr.rel (0) target = $region29
    $region28: #{dqn_forward.1} parent=1 // pred_region
      _
    $region29: #{dqn_forward.1} parent=1 // pred_fallthru
      _
    %v28 = vld [vmem:[%s1] sm:$0xf]
    %v29 = vld [vmem:[%s0] sm:$0xff]
    %v30 = vld [vmem:[%s0 + $0x8] sm:$0xff]
    %v31 = vld [vmem:[%s0 + $0x10] sm:$0xff]
    %v32 = vld [vmem:[%s0 + $0x18] sm:$0xff]
    %v33 = vld [vmem:[%s0 + $0x20] sm:$0xff]
    %v34 = vld [vmem:[%s0 + $0x28] sm:$0xff]
    %v35 = vld [vmem:[%s0 + $0x30] sm:$0xff]
    %v36 = vld [vmem:[%s0 + $0x38] sm:$0xff]
    %v37 = vld [vmem:[%s0 + $0x40] sm:$0x33]
    %v38 = vld [vmem:[%s0 + $0x48] sm:$0x33]
    %v39 = vld [vmem:[%s2] sm:$0xff]
    %41 = vset.pattern.permute.xlu0 0
    %42 = vperm.xlu0 %41, %v39
    %v43 = vpop.permute.xlu0 %42
    %v55 = vunpack.c.l.b16 %v29
    %v56 = vunpack.c.h.b16 %v29
    %v57 = vunpack.c.l.b16 %v30
    %v58 = vunpack.c.h.b16 %v30
    %v59 = vunpack.c.l.b16 %v31
    %v60 = vunpack.c.h.b16 %v31
    %v61 = vunpack.c.l.b16 %v32
    %v62 = vunpack.c.h.b16 %v32
    %v63 = vunpack.c.l.b16 %v33
    %v64 = vunpack.c.h.b16 %v33
    %v65 = vunpack.c.l.b16 %v34
    %v66 = vunpack.c.h.b16 %v34
    %v67 = vunpack.c.l.b16 %v35
    %v68 = vunpack.c.h.b16 %v35
    %v69 = vunpack.c.l.b16 %v36
    %v70 = vunpack.c.h.b16 %v36
    %v71 = vunpack.c.l.b16 %v37
    %v72 = vunpack.c.h.b16 %v37
    %v73 = vunpack.c.l.b16 %v38
    %v74 = vunpack.c.h.b16 %v38
    %v75 = vpack.c.b16 %v59, %v55
    %v76 = vpack.c.b16 %v60, %v56
    %v77 = vpack.c.b16 %v61, %v57
    %v78 = vpack.c.b16 %v62, %v58
    %v79 = vpack.c.b16 %v67, %v63
    %v80 = vpack.c.b16 %v68, %v64
    %v81 = vpack.c.b16 %v69, %v65
    %v82 = vpack.c.b16 %v70, %v66
    %v83 = vpack.c.b16 %v71, %v71
    %v84 = vpack.c.b16 %v72, %v72
    %v85 = vpack.c.b16 %v73, %v73
    %v86 = vpack.c.b16 %v74, %v74
    %vm95 = vcmask 293888
    %v97 = vsel %vm95, %v28, 0
    %vm99 = vcmask 1041408
    %v101 = vsel %vm99, %v83, 0
    %v104 = vsel %vm99, %v84, 0
    %v107 = vsel %vm99, %v85, 0
    %v110 = vsel %vm99, %v86, 0
    %112 = vmatprep.subr.bf16.mxu0 %v76
    %113 = vmatpush1.bf16.msra.mxu0 %v75
    %114 = vmatprep.subr.bf16.mxu0 %v80
    %115 = vmatpush1.bf16.msra.mxu0 %v79
    %116 = vmatprep.subr.bf16.mxu0 %v104
    %117 = vmatpush1.bf16.msra.mxu0 %v101
    %118 = vmatprep.subr.bf16.mxu0 0
    %119 = vmatpush1.bf16.msra.mxu0 0
    %120 = vmatprep.subr.bf16.mxu0 0
    %121 = vmatpush1.bf16.msra.mxu0 0
    %122 = vmatprep.subr.bf16.mxu0 0
    %123 = vmatpush1.bf16.msra.mxu0 0
    %124 = vmatprep.subr.bf16.mxu0 0
    %125 = vmatpush1.bf16.msra.mxu0 0
    %126 = vmatprep.subr.bf16.mxu0 0
    %127 = vmatpush1.bf16.msra.mxu0 0
    %128 = vmatprep.subr.bf16.mxu0 0
    %129 = vmatpush1.bf16.msra.mxu0 0
    %130 = vmatprep.subr.bf16.mxu0 0
    %131 = vmatpush1.bf16.msra.mxu0 0
    %132 = vmatprep.subr.bf16.mxu0 0
    %133 = vmatpush1.bf16.msra.mxu0 0
    %134 = vmatprep.subr.bf16.mxu0 0
    %135 = vmatpush1.bf16.msra.mxu0 0
    %136 = vmatprep.subr.bf16.mxu0 0
    %137 = vmatpush1.bf16.msra.mxu0 0
    %138 = vmatprep.subr.bf16.mxu0 0
    %139 = vmatpush1.bf16.msra.mxu0 0
    %140 = vmatprep.subr.bf16.mxu0 0
    %141 = vmatpush1.bf16.msra.mxu0 0
    %142 = vmatprep.subr.bf16.mxu0 0
    %143 = vmatpush1.bf16.msra.mxu0 0
    %144 = vmatprep.mubr.bf16.mxu0 0
    %145 = vmatmul.mubr.bf16.gmra.mrb[0].mxu0 %v97
    %v146 = vpop.f32.mrb[0].mxu0
    %v147 = vadd.f32 %v43, %v146
    %v148 = vpop.f32.mrb[0].mxu0
    %v149 = vadd.f32 %v43, %v148
    %v150 = vpop.f32.mrb[0].mxu0
    %v151 = vpop.f32.mrb[0].mxu0
    %152 = vdwg.mxu0
    %153 = vmatprep.subr.bf16.mxu0 %v78
    %154 = vmatpush1.bf16.msra.mxu0 %v77
    %155 = vmatprep.subr.bf16.mxu0 %v82
    %156 = vmatpush1.bf16.msra.mxu0 %v81
    %157 = vmatprep.subr.bf16.mxu0 %v110
    %158 = vmatpush1.bf16.msra.mxu0 %v107
    %159 = vmatprep.subr.bf16.mxu0 0
    %160 = vmatpush1.bf16.msra.mxu0 0
    %161 = vmatprep.subr.bf16.mxu0 0
    %162 = vmatpush1.bf16.msra.mxu0 0
    %163 = vmatprep.subr.bf16.mxu0 0
    %164 = vmatpush1.bf16.msra.mxu0 0
    %165 = vmatprep.subr.bf16.mxu0 0
    %166 = vmatpush1.bf16.msra.mxu0 0
    %167 = vmatprep.subr.bf16.mxu0 0
    %168 = vmatpush1.bf16.msra.mxu0 0
    %169 = vmatprep.subr.bf16.mxu0 0
    %170 = vmatpush1.bf16.msra.mxu0 0
    %171 = vmatprep.subr.bf16.mxu0 0
    %172 = vmatpush1.bf16.msra.mxu0 0
    %173 = vmatprep.subr.bf16.mxu0 0
    %174 = vmatpush1.bf16.msra.mxu0 0
    %175 = vmatprep.subr.bf16.mxu0 0
    %176 = vmatpush1.bf16.msra.mxu0 0
    %177 = vmatprep.subr.bf16.mxu0 0
    %178 = vmatpush1.bf16.msra.mxu0 0
    %179 = vmatprep.subr.bf16.mxu0 0
    %180 = vmatpush1.bf16.msra.mxu0 0
    %181 = vmatprep.subr.bf16.mxu0 0
    %182 = vmatpush1.bf16.msra.mxu0 0
    %183 = vmatprep.subr.bf16.mxu0 0
    %184 = vmatpush1.bf16.msra.mxu0 0
    %185 = vmatprep.mubr.bf16.mxu0 0
    %186 = vmatmul.mubr.bf16.gmra.mrb[0].mxu0 %v97
    %v187 = vpop.f32.mrb[0].mxu0
    %v188 = vadd.f32 %v43, %v187
    %v189 = vpop.f32.mrb[0].mxu0
    %v190 = vadd.f32 %v43, %v189
    %v191 = vpop.f32.mrb[0].mxu0
    %v192 = vpop.f32.mrb[0].mxu0
    %193 = vdwg.mxu0
    %v194 = vmax.f32 %v147, 0.0
    %v195 = vmax.f32 %v149, 0.0
    %v196 = vmax.f32 %v188, 0.0
    %v197 = vmax.f32 %v190, 0.0
    %201 = vrot.lane.b32.xlu0 %v195, 60
    %v202 = vpop.permute.xlu0 %201
    %203 = vrot.lane.b32.xlu0 %v196, 60
    %v204 = vpop.permute.xlu0 %203
    %205 = vrot.lane.b32.xlu0 %v197, 60
    %v206 = vpop.permute.xlu0 %205
    %vm207 = vcmask 490496
    %v208 = vsel %vm207, %v202, %v204
    %v209 = vsel %vm207, %v204, %v206
    %v212 = vcombine.high %v194, 0.0
    %v214 = vunpack.c.l.s4 1983009808
    %v215 = vunpack.c.0.s8 %v214
    %v216 = vlaneseq
    %v217 = vshrl.u32 %v216, 7
    %v218 = vsub.s32 %v215, %v217
    %v219 = vrot.slane %v194, %v218
    %v221 = vunpack.c.l.s4 1983009808
    %v222 = vunpack.c.0.s8 %v221
    %v223 = vlaneseq
    %v224 = vshrl.u32 %v223, 7
    %v225 = vsub.s32 %v222, %v224
    %v226 = vrot.slane %v212, %v225
    %v227 = vcombine.high %v208, 0.0
    %v229 = vunpack.c.l.s4 1983009808
    %v230 = vunpack.c.0.s8 %v229
    %v231 = vlaneseq
    %v232 = vshrl.u32 %v231, 7
    %v233 = vsub.s32 %v230, %v232
    %v234 = vrot.slane %v208, %v233
    %v236 = vunpack.c.l.s4 1983009808
    %v237 = vunpack.c.0.s8 %v236
    %v238 = vlaneseq
    %v239 = vshrl.u32 %v238, 7
    %v240 = vsub.s32 %v237, %v239
    %v241 = vrot.slane %v227, %v240
    %v242 = vcombine.low %v219, %v234
    %v243 = vcombine.high %v219, %v234
    %v245 = vunpack.c.l.s4 1934713408
    %v246 = vunpack.c.0.s8 %v245
    %v247 = vlaneseq
    %v248 = vshrl.u32 %v247, 7
    %v249 = vsub.s32 %v246, %v248
    %v250 = vrot.slane %v242, %v249
    %v252 = vunpack.c.l.s4 1934713408
    %v253 = vunpack.c.0.s8 %v252
    %v254 = vlaneseq
    %v255 = vshrl.u32 %v254, 7
    %v256 = vsub.s32 %v253, %v255
    %v257 = vrot.slane %v243, %v256
    %v258 = vcombine.low %v226, %v241
    %v259 = vcombine.high %v226, %v241
    %v261 = vunpack.c.l.s4 1934713408
    %v262 = vunpack.c.0.s8 %v261
    %v263 = vlaneseq
    %v264 = vshrl.u32 %v263, 7
    %v265 = vsub.s32 %v262, %v264
    %v266 = vrot.slane %v258, %v265
    %v268 = vunpack.c.l.s4 1934713408
    %v269 = vunpack.c.0.s8 %v268
    %v270 = vlaneseq
    %v271 = vshrl.u32 %v270, 7
    %v272 = vsub.s32 %v269, %v271
    %v273 = vrot.slane %v259, %v272
    %v274 = vcombine.high %v250, 0.0
    %v275 = vcombine.high %v257, 0.0
    %v276 = vcombine.high %v266, 0.0
    %v277 = vcombine.high %v273, 0.0
    %v278 = vcombine.high %v195, 0.0
    %v280 = vunpack.c.l.s4 1983009808
    %v281 = vunpack.c.0.s8 %v280
    %v282 = vlaneseq
    %v283 = vshrl.u32 %v282, 7
    %v284 = vsub.s32 %v281, %v283
    %v285 = vrot.slane %v195, %v284
    %v287 = vunpack.c.l.s4 1983009808
    %v288 = vunpack.c.0.s8 %v287
    %v289 = vlaneseq
    %v290 = vshrl.u32 %v289, 7
    %v291 = vsub.s32 %v288, %v290
    %v292 = vrot.slane %v278, %v291
    %v293 = vcombine.high %v209, 0.0
    %v295 = vunpack.c.l.s4 1983009808
    %v296 = vunpack.c.0.s8 %v295
    %v297 = vlaneseq
    %v298 = vshrl.u32 %v297, 7
    %v299 = vsub.s32 %v296, %v298
    %v300 = vrot.slane %v209, %v299
    %v302 = vunpack.c.l.s4 1983009808
    %v303 = vunpack.c.0.s8 %v302
    %v304 = vlaneseq
    %v305 = vshrl.u32 %v304, 7
    %v306 = vsub.s32 %v303, %v305
    %v307 = vrot.slane %v293, %v306
    %v308 = vcombine.low %v285, %v300
    %v309 = vcombine.high %v285, %v300
    %v311 = vunpack.c.l.s4 1934713408
    %v312 = vunpack.c.0.s8 %v311
    %v313 = vlaneseq
    %v314 = vshrl.u32 %v313, 7
    %v315 = vsub.s32 %v312, %v314
    %v316 = vrot.slane %v308, %v315
    %v318 = vunpack.c.l.s4 1934713408
    %v319 = vunpack.c.0.s8 %v318
    %v320 = vlaneseq
    %v321 = vshrl.u32 %v320, 7
    %v322 = vsub.s32 %v319, %v321
    %v323 = vrot.slane %v309, %v322
    %v324 = vcombine.low %v292, %v307
    %v325 = vcombine.high %v292, %v307
    %v327 = vunpack.c.l.s4 1934713408
    %v328 = vunpack.c.0.s8 %v327
    %v329 = vlaneseq
    %v330 = vshrl.u32 %v329, 7
    %v331 = vsub.s32 %v328, %v330
    %v332 = vrot.slane %v324, %v331
    %v334 = vunpack.c.l.s4 1934713408
    %v335 = vunpack.c.0.s8 %v334
    %v336 = vlaneseq
    %v337 = vshrl.u32 %v336, 7
    %v338 = vsub.s32 %v335, %v337
    %v339 = vrot.slane %v325, %v338
    %v340 = vcombine.high %v316, 0.0
    %v341 = vcombine.high %v323, 0.0
    %v342 = vcombine.high %v332, 0.0
    %v343 = vcombine.high %v339, 0.0
    %v344 = vpack.c.bf16 %v250, %v250
    %v345 = vpack.c.bf16 %v316, %v316
    %v346 = vpack.c.bf16 %v274, %v274
    %v347 = vpack.c.bf16 %v340, %v340
    %v348 = vpack.c.bf16 %v257, %v257
    %v349 = vpack.c.bf16 %v323, %v323
    %v350 = vpack.c.bf16 %v275, %v275
    %v351 = vpack.c.bf16 %v341, %v341
    %v352 = vpack.c.bf16 %v266, %v266
    %v353 = vpack.c.bf16 %v332, %v332
    %v354 = vpack.c.bf16 %v276, %v276
    %v355 = vpack.c.bf16 %v342, %v342
    %v356 = vpack.c.bf16 %v273, %v273
    %v357 = vpack.c.bf16 %v339, %v339
    %v358 = vpack.c.bf16 %v277, %v277
    %v359 = vpack.c.bf16 %v343, %v343
    %v360 = vld [vmem:[%s3] sm:$0xf]
    %v361 = vld [vmem:[%s3 + $0x4] sm:$0xf]
    %v362 = vld [vmem:[%s3 + $0x8] sm:$0xf]
    %v363 = vld [vmem:[%s3 + $0xc] sm:$0xf]
    %v364 = vld [vmem:[%s3 + $0x10] sm:$0xf]
    %v365 = vld [vmem:[%s3 + $0x14] sm:$0xf]
    %v366 = vld [vmem:[%s3 + $0x18] sm:$0xf]
    %v367 = vld [vmem:[%s3 + $0x1c] sm:$0xf]
    %v368 = vld [vmem:[%s3 + $0x20] sm:$0xf]
    %v369 = vld [vmem:[%s3 + $0x24] sm:$0xf]
    %v370 = vld [vmem:[%s3 + $0x28] sm:$0xf]
    %v371 = vld [vmem:[%s3 + $0x2c] sm:$0xf]
    %v372 = vld [vmem:[%s3 + $0x30] sm:$0xf]
    %v373 = vld [vmem:[%s3 + $0x34] sm:$0xf]
    %v374 = vld [vmem:[%s3 + $0x38] sm:$0xf]
    %v375 = vld [vmem:[%s3 + $0x3c] sm:$0xf]
    %v376 = vld [vmem:[%s3 + $0x40] sm:$0xf]
    %v377 = vld [vmem:[%s3 + $0x44] sm:$0xf]
    %v378 = vld [vmem:[%s3 + $0x48] sm:$0xf]
    %v379 = vld [vmem:[%s3 + $0x4c] sm:$0xf]
    %v380 = vld [vmem:[%s3 + $0x50] sm:$0xf]
    %v381 = vld [vmem:[%s3 + $0x54] sm:$0xf]
    %v382 = vld [vmem:[%s3 + $0x58] sm:$0xf]
    %v383 = vld [vmem:[%s3 + $0x5c] sm:$0xf]
    %v384 = vld [vmem:[%s3 + $0x60] sm:$0x3]
    %s385 = scalar_lea.vmem %s3, 100
    %v386 = vld [vmem:[%s385] sm:$0xf]
    %v387 = vld [vmem:[%s385 + $0x4] sm:$0xf]
    %v388 = vld [vmem:[%s385 + $0x8] sm:$0xf]
    %v389 = vld [vmem:[%s385 + $0xc] sm:$0xf]
    %v390 = vld [vmem:[%s385 + $0x10] sm:$0xf]
    %v391 = vld [vmem:[%s385 + $0x14] sm:$0xf]
    %v392 = vld [vmem:[%s385 + $0x18] sm:$0xf]
    %v393 = vld [vmem:[%s385 + $0x1c] sm:$0xf]
    %v394 = vld [vmem:[%s385 + $0x20] sm:$0xf]
    %v395 = vld [vmem:[%s385 + $0x24] sm:$0xf]
    %v396 = vld [vmem:[%s385 + $0x28] sm:$0xf]
    %v397 = vld [vmem:[%s385 + $0x2c] sm:$0xf]
    %v398 = vld [vmem:[%s385 + $0x30] sm:$0xf]
    %v399 = vld [vmem:[%s385 + $0x34] sm:$0xf]
    %v400 = vld [vmem:[%s385 + $0x38] sm:$0xf]
    %v401 = vld [vmem:[%s385 + $0x3c] sm:$0xf]
    %v402 = vld [vmem:[%s385 + $0x40] sm:$0xf]
    %v403 = vld [vmem:[%s385 + $0x44] sm:$0xf]
    %v404 = vld [vmem:[%s385 + $0x48] sm:$0xf]
    %v405 = vld [vmem:[%s385 + $0x4c] sm:$0xf]
    %v406 = vld [vmem:[%s385 + $0x50] sm:$0xf]
    %v407 = vld [vmem:[%s385 + $0x54] sm:$0xf]
    %v408 = vld [vmem:[%s385 + $0x58] sm:$0xf]
    %v409 = vld [vmem:[%s385 + $0x5c] sm:$0xf]
    %v410 = vld [vmem:[%s385 + $0x60] sm:$0x3]
    %v436 = vunpack.c.l.b16 %v386
    %v437 = vunpack.c.l.b16 %v387
    %v438 = vunpack.c.l.b16 %v388
    %v439 = vunpack.c.l.b16 %v389
    %v440 = vunpack.c.l.b16 %v390
    %v441 = vunpack.c.l.b16 %v391
    %v442 = vunpack.c.l.b16 %v392
    %v443 = vunpack.c.l.b16 %v393
    %v444 = vunpack.c.l.b16 %v394
    %v445 = vunpack.c.l.b16 %v395
    %v446 = vunpack.c.l.b16 %v396
    %v447 = vunpack.c.l.b16 %v397
    %v448 = vunpack.c.l.b16 %v398
    %v449 = vunpack.c.l.b16 %v399
    %v450 = vunpack.c.l.b16 %v400
    %v451 = vunpack.c.l.b16 %v401
    %v452 = vunpack.c.l.b16 %v402
    %v453 = vunpack.c.l.b16 %v403
    %v454 = vunpack.c.l.b16 %v404
    %v455 = vunpack.c.l.b16 %v405
    %v456 = vunpack.c.l.b16 %v406
    %v457 = vunpack.c.l.b16 %v407
    %v458 = vunpack.c.l.b16 %v408
    %v459 = vunpack.c.l.b16 %v409
    %v460 = vunpack.c.l.b16 %v410
    %v461 = vpack.c.b16 %v437, %v436
    %v462 = vpack.c.b16 %v439, %v438
    %v463 = vpack.c.b16 %v441, %v440
    %v464 = vpack.c.b16 %v443, %v442
    %v465 = vpack.c.b16 %v445, %v444
    %v466 = vpack.c.b16 %v447, %v446
    %v467 = vpack.c.b16 %v449, %v448
    %v468 = vpack.c.b16 %v451, %v450
    %v469 = vpack.c.b16 %v453, %v452
    %v470 = vpack.c.b16 %v455, %v454
    %v471 = vpack.c.b16 %v457, %v456
    %v472 = vpack.c.b16 %v459, %v458
    %v473 = vpack.c.b16 %v460, %v460
    %vm486 = vcmask 556032
    %v488 = vsel %vm486, %v347, 0
    %v491 = vsel %vm99, %v473, 0
    %493 = vmatprep.subr.bf16.mxu0 0
    %494 = vmatpush1.bf16.msra.mxu0 %v461
    %495 = vmatprep.subr.bf16.mxu0 0
    %496 = vmatpush1.bf16.msra.mxu0 %v462
    %497 = vmatprep.subr.bf16.mxu0 0
    %498 = vmatpush1.bf16.msra.mxu0 %v463
    %499 = vmatprep.subr.bf16.mxu0 0
    %500 = vmatpush1.bf16.msra.mxu0 %v464
    %501 = vmatprep.subr.bf16.mxu0 0
    %502 = vmatpush1.bf16.msra.mxu0 %v465
    %503 = vmatprep.subr.bf16.mxu0 0
    %504 = vmatpush1.bf16.msra.mxu0 %v466
    %505 = vmatprep.subr.bf16.mxu0 0
    %506 = vmatpush1.bf16.msra.mxu0 %v467
    %507 = vmatprep.subr.bf16.mxu0 0
    %508 = vmatpush1.bf16.msra.mxu0 %v468
    %509 = vmatprep.subr.bf16.mxu0 0
    %510 = vmatpush1.bf16.msra.mxu0 %v469
    %511 = vmatprep.subr.bf16.mxu0 0
    %512 = vmatpush1.bf16.msra.mxu0 %v470
    %513 = vmatprep.subr.bf16.mxu0 0
    %514 = vmatpush1.bf16.msra.mxu0 %v471
    %515 = vmatprep.subr.bf16.mxu0 0
    %516 = vmatpush1.bf16.msra.mxu0 %v472
    %517 = vmatprep.subr.bf16.mxu0 0
    %518 = vmatpush1.bf16.msra.mxu0 %v491
    %519 = vmatprep.subr.bf16.mxu0 0
    %520 = vmatpush1.bf16.msra.mxu0 0
    %521 = vmatprep.subr.bf16.mxu0 0
    %522 = vmatpush1.bf16.msra.mxu0 0
    %523 = vmatprep.subr.bf16.mxu0 0
    %524 = vmatpush1.bf16.msra.mxu0 0
    %525 = vmatprep.mubr.bf16.mxu0 %v488
    %526 = vmatmul.mubr.bf16.gmra.mrb[0].mxu0 %v346
    %v527 = vpop.f32.mrb[0].mxu0
    %v528 = vadd.f32 0.0, %v527
    %v529 = vpop.f32.mrb[0].mxu0
    %v530 = vpop.f32.mrb[0].mxu0
    %v531 = vpop.f32.mrb[0].mxu0
    %532 = vdwg.mxu0
    %v558 = vunpack.c.l.b16 %v360
    %v559 = vunpack.c.l.b16 %v361
    %v560 = vunpack.c.l.b16 %v362
    %v561 = vunpack.c.l.b16 %v363
    %v562 = vunpack.c.l.b16 %v364
    %v563 = vunpack.c.l.b16 %v365
    %v564 = vunpack.c.l.b16 %v366
    %v565 = vunpack.c.l.b16 %v367
    %v566 = vunpack.c.l.b16 %v368
    %v567 = vunpack.c.l.b16 %v369
    %v568 = vunpack.c.l.b16 %v370
    %v569 = vunpack.c.l.b16 %v371
    %v570 = vunpack.c.l.b16 %v372
    %v571 = vunpack.c.l.b16 %v373
    %v572 = vunpack.c.l.b16 %v374
    %v573 = vunpack.c.l.b16 %v375
    %v574 = vunpack.c.l.b16 %v376
    %v575 = vunpack.c.l.b16 %v377
    %v576 = vunpack.c.l.b16 %v378
    %v577 = vunpack.c.l.b16 %v379
    %v578 = vunpack.c.l.b16 %v380
    %v579 = vunpack.c.l.b16 %v381
    %v580 = vunpack.c.l.b16 %v382
    %v581 = vunpack.c.l.b16 %v383
    %v582 = vunpack.c.l.b16 %v384
    %v583 = vpack.c.b16 %v559, %v558
    %v584 = vpack.c.b16 %v561, %v560
    %v585 = vpack.c.b16 %v563, %v562
    %v586 = vpack.c.b16 %v565, %v564
    %v587 = vpack.c.b16 %v567, %v566
    %v588 = vpack.c.b16 %v569, %v568
    %v589 = vpack.c.b16 %v571, %v570
    %v590 = vpack.c.b16 %v573, %v572
    %v591 = vpack.c.b16 %v575, %v574
    %v592 = vpack.c.b16 %v577, %v576
    %v593 = vpack.c.b16 %v579, %v578
    %v594 = vpack.c.b16 %v581, %v580
    %v595 = vpack.c.b16 %v582, %v582
    %v609 = vsel %vm486, %v345, 0
    %v612 = vsel %vm99, %v595, 0
    %614 = vmatprep.subr.bf16.mxu0 0
    %615 = vmatpush1.bf16.msra.mxu0 %v583
    %616 = vmatprep.subr.bf16.mxu0 0
    %617 = vmatpush1.bf16.msra.mxu0 %v584
    %618 = vmatprep.subr.bf16.mxu0 0
    %619 = vmatpush1.bf16.msra.mxu0 %v585
    %620 = vmatprep.subr.bf16.mxu0 0
    %621 = vmatpush1.bf16.msra.mxu0 %v586
    %622 = vmatprep.subr.bf16.mxu0 0
    %623 = vmatpush1.bf16.msra.mxu0 %v587
    %624 = vmatprep.subr.bf16.mxu0 0
    %625 = vmatpush1.bf16.msra.mxu0 %v588
    %626 = vmatprep.subr.bf16.mxu0 0
    %627 = vmatpush1.bf16.msra.mxu0 %v589
    %628 = vmatprep.subr.bf16.mxu0 0
    %629 = vmatpush1.bf16.msra.mxu0 %v590
    %630 = vmatprep.subr.bf16.mxu0 0
    %631 = vmatpush1.bf16.msra.mxu0 %v591
    %632 = vmatprep.subr.bf16.mxu0 0
    %633 = vmatpush1.bf16.msra.mxu0 %v592
    %634 = vmatprep.subr.bf16.mxu0 0
    %635 = vmatpush1.bf16.msra.mxu0 %v593
    %636 = vmatprep.subr.bf16.mxu0 0
    %637 = vmatpush1.bf16.msra.mxu0 %v594
    %638 = vmatprep.subr.bf16.mxu0 0
    %639 = vmatpush1.bf16.msra.mxu0 %v612
    %640 = vmatprep.subr.bf16.mxu0 0
    %641 = vmatpush1.bf16.msra.mxu0 0
    %642 = vmatprep.subr.bf16.mxu0 0
    %643 = vmatpush1.bf16.msra.mxu0 0
    %644 = vmatprep.subr.bf16.mxu0 0
    %645 = vmatpush1.bf16.msra.mxu0 0
    %646 = vmatprep.mubr.bf16.mxu0 %v609
    %647 = vmatmul.mubr.bf16.gmra.mrb[0].mxu0 %v344
    %v648 = vpop.f32.mrb[0].mxu0
    %v649 = vadd.f32 %v528, %v648
    %v650 = vpop.f32.mrb[0].mxu0
    %v651 = vpop.f32.mrb[0].mxu0
    %v652 = vpop.f32.mrb[0].mxu0
    %653 = vdwg.mxu0
    %s654 = scalar_lea.vmem %s3, 200
    %v655 = vld [vmem:[%s654] sm:$0xf]
    %v656 = vld [vmem:[%s654 + $0x4] sm:$0xf]
    %v657 = vld [vmem:[%s654 + $0x8] sm:$0xf]
    %v658 = vld [vmem:[%s654 + $0xc] sm:$0xf]
    %v659 = vld [vmem:[%s654 + $0x10] sm:$0xf]
    %v660 = vld [vmem:[%s654 + $0x14] sm:$0xf]
    %v661 = vld [vmem:[%s654 + $0x18] sm:$0xf]
    %v662 = vld [vmem:[%s654 + $0x1c] sm:$0xf]
    %v663 = vld [vmem:[%s654 + $0x20] sm:$0xf]
    %v664 = vld [vmem:[%s654 + $0x24] sm:$0xf]
    %v665 = vld [vmem:[%s654 + $0x28] sm:$0xf]
    %v666 = vld [vmem:[%s654 + $0x2c] sm:$0xf]
    %v667 = vld [vmem:[%s654 + $0x30] sm:$0xf]
    %v668 = vld [vmem:[%s654 + $0x34] sm:$0xf]
    %v669 = vld [vmem:[%s654 + $0x38] sm:$0xf]
    %v670 = vld [vmem:[%s654 + $0x3c] sm:$0xf]
    %v671 = vld [vmem:[%s654 + $0x40] sm:$0xf]
    %v672 = vld [vmem:[%s654 + $0x44] sm:$0xf]
    %v673 = vld [vmem:[%s654 + $0x48] sm:$0xf]
    %v674 = vld [vmem:[%s654 + $0x4c] sm:$0xf]
    %v675 = vld [vmem:[%s654 + $0x50] sm:$0xf]
    %v676 = vld [vmem:[%s654 + $0x54] sm:$0xf]
    %v677 = vld [vmem:[%s654 + $0x58] sm:$0xf]
    %v678 = vld [vmem:[%s654 + $0x5c] sm:$0xf]
    %v679 = vld [vmem:[%s654 + $0x60] sm:$0x3]
    %v705 = vunpack.c.l.b16 %v655
    %v706 = vunpack.c.l.b16 %v656
    %v707 = vunpack.c.l.b16 %v657
    %v708 = vunpack.c.l.b16 %v658
    %v709 = vunpack.c.l.b16 %v659
    %v710 = vunpack.c.l.b16 %v660
    %v711 = vunpack.c.l.b16 %v661
    %v712 = vunpack.c.l.b16 %v662
    %v713 = vunpack.c.l.b16 %v663
    %v714 = vunpack.c.l.b16 %v664
    %v715 = vunpack.c.l.b16 %v665
    %v716 = vunpack.c.l.b16 %v666
    %v717 = vunpack.c.l.b16 %v667
    %v718 = vunpack.c.l.b16 %v668
    %v719 = vunpack.c.l.b16 %v669
    %v720 = vunpack.c.l.b16 %v670
    %v721 = vunpack.c.l.b16 %v671
    %v722 = vunpack.c.l.b16 %v672
    %v723 = vunpack.c.l.b16 %v673
    %v724 = vunpack.c.l.b16 %v674
    %v725 = vunpack.c.l.b16 %v675
    %v726 = vunpack.c.l.b16 %v676
    %v727 = vunpack.c.l.b16 %v677
    %v728 = vunpack.c.l.b16 %v678
    %v729 = vunpack.c.l.b16 %v679
    %v730 = vpack.c.b16 %v706, %v705
    %v731 = vpack.c.b16 %v708, %v707
    %v732 = vpack.c.b16 %v710, %v709
    %v733 = vpack.c.b16 %v712, %v711
    %v734 = vpack.c.b16 %v714, %v713
    %v735 = vpack.c.b16 %v716, %v715
    %v736 = vpack.c.b16 %v718, %v717
    %v737 = vpack.c.b16 %v720, %v719
    %v738 = vpack.c.b16 %v722, %v721
    %v739 = vpack.c.b16 %v724, %v723
    %v740 = vpack.c.b16 %v726, %v725
    %v741 = vpack.c.b16 %v728, %v727
    %v742 = vpack.c.b16 %v729, %v729
    %v756 = vsel %vm486, %v349, 0
    %v759 = vsel %vm99, %v742, 0
    %761 = vmatprep.subr.bf16.mxu0 0
    %762 = vmatpush1.bf16.msra.mxu0 %v730
    %763 = vmatprep.subr.bf16.mxu0 0
    %764 = vmatpush1.bf16.msra.mxu0 %v731
    %765 = vmatprep.subr.bf16.mxu0 0
    %766 = vmatpush1.bf16.msra.mxu0 %v732
    %767 = vmatprep.subr.bf16.mxu0 0
    %768 = vmatpush1.bf16.msra.mxu0 %v733
    %769 = vmatprep.subr.bf16.mxu0 0
    %770 = vmatpush1.bf16.msra.mxu0 %v734
    %771 = vmatprep.subr.bf16.mxu0 0
    %772 = vmatpush1.bf16.msra.mxu0 %v735
    %773 = vmatprep.subr.bf16.mxu0 0
    %774 = vmatpush1.bf16.msra.mxu0 %v736
    %775 = vmatprep.subr.bf16.mxu0 0
    %776 = vmatpush1.bf16.msra.mxu0 %v737
    %777 = vmatprep.subr.bf16.mxu0 0
    %778 = vmatpush1.bf16.msra.mxu0 %v738
    %779 = vmatprep.subr.bf16.mxu0 0
    %780 = vmatpush1.bf16.msra.mxu0 %v739
    %781 = vmatprep.subr.bf16.mxu0 0
    %782 = vmatpush1.bf16.msra.mxu0 %v740
    %783 = vmatprep.subr.bf16.mxu0 0
    %784 = vmatpush1.bf16.msra.mxu0 %v741
    %785 = vmatprep.subr.bf16.mxu0 0
    %786 = vmatpush1.bf16.msra.mxu0 %v759
    %787 = vmatprep.subr.bf16.mxu0 0
    %788 = vmatpush1.bf16.msra.mxu0 0
    %789 = vmatprep.subr.bf16.mxu0 0
    %790 = vmatpush1.bf16.msra.mxu0 0
    %791 = vmatprep.subr.bf16.mxu0 0
    %792 = vmatpush1.bf16.msra.mxu0 0
    %793 = vmatprep.mubr.bf16.mxu0 %v756
    %794 = vmatmul.mubr.bf16.gmra.mrb[0].mxu0 %v348
    %v795 = vpop.f32.mrb[0].mxu0
    %v796 = vadd.f32 0.0, %v795
    %v797 = vpop.f32.mrb[0].mxu0
    %v798 = vpop.f32.mrb[0].mxu0
    %v799 = vpop.f32.mrb[0].mxu0
    %800 = vdwg.mxu0
    %v801 = vadd.f32 %v649, %v796
    %s802 = scalar_lea.vmem %s3, 300
    %v803 = vld [vmem:[%s802] sm:$0xf]
    %v804 = vld [vmem:[%s802 + $0x4] sm:$0xf]
    %v805 = vld [vmem:[%s802 + $0x8] sm:$0xf]
    %v806 = vld [vmem:[%s802 + $0xc] sm:$0xf]
    %v807 = vld [vmem:[%s802 + $0x10] sm:$0xf]
    %v808 = vld [vmem:[%s802 + $0x14] sm:$0xf]
    %v809 = vld [vmem:[%s802 + $0x18] sm:$0xf]
    %v810 = vld [vmem:[%s802 + $0x1c] sm:$0xf]
    %v811 = vld [vmem:[%s802 + $0x20] sm:$0xf]
    %v812 = vld [vmem:[%s802 + $0x24] sm:$0xf]
    %v813 = vld [vmem:[%s802 + $0x28] sm:$0xf]
    %v814 = vld [vmem:[%s802 + $0x2c] sm:$0xf]
    %v815 = vld [vmem:[%s802 + $0x30] sm:$0xf]
    %v816 = vld [vmem:[%s802 + $0x34] sm:$0xf]
    %v817 = vld [vmem:[%s802 + $0x38] sm:$0xf]
    %v818 = vld [vmem:[%s802 + $0x3c] sm:$0xf]
    %v819 = vld [vmem:[%s802 + $0x40] sm:$0xf]
    %v820 = vld [vmem:[%s802 + $0x44] sm:$0xf]
    %v821 = vld [vmem:[%s802 + $0x48] sm:$0xf]
    %v822 = vld [vmem:[%s802 + $0x4c] sm:$0xf]
    %v823 = vld [vmem:[%s802 + $0x50] sm:$0xf]
    %v824 = vld [vmem:[%s802 + $0x54] sm:$0xf]
    %v825 = vld [vmem:[%s802 + $0x58] sm:$0xf]
    %v826 = vld [vmem:[%s802 + $0x5c] sm:$0xf]
    %v827 = vld [vmem:[%s802 + $0x60] sm:$0x3]
    %v853 = vunpack.c.l.b16 %v803
    %v854 = vunpack.c.l.b16 %v804
    %v855 = vunpack.c.l.b16 %v805
    %v856 = vunpack.c.l.b16 %v806
    %v857 = vunpack.c.l.b16 %v807
    %v858 = vunpack.c.l.b16 %v808
    %v859 = vunpack.c.l.b16 %v809
    %v860 = vunpack.c.l.b16 %v810
    %v861 = vunpack.c.l.b16 %v811
    %v862 = vunpack.c.l.b16 %v812
    %v863 = vunpack.c.l.b16 %v813
    %v864 = vunpack.c.l.b16 %v814
    %v865 = vunpack.c.l.b16 %v815
    %v866 = vunpack.c.l.b16 %v816
    %v867 = vunpack.c.l.b16 %v817
    %v868 = vunpack.c.l.b16 %v818
    %v869 = vunpack.c.l.b16 %v819
    %v870 = vunpack.c.l.b16 %v820
    %v871 = vunpack.c.l.b16 %v821
    %v872 = vunpack.c.l.b16 %v822
    %v873 = vunpack.c.l.b16 %v823
    %v874 = vunpack.c.l.b16 %v824
    %v875 = vunpack.c.l.b16 %v825
    %v876 = vunpack.c.l.b16 %v826
    %v877 = vunpack.c.l.b16 %v827
    %v878 = vpack.c.b16 %v854, %v853
    %v879 = vpack.c.b16 %v856, %v855
    %v880 = vpack.c.b16 %v858, %v857
    %v881 = vpack.c.b16 %v860, %v859
    %v882 = vpack.c.b16 %v862, %v861
    %v883 = vpack.c.b16 %v864, %v863
    %v884 = vpack.c.b16 %v866, %v865
    %v885 = vpack.c.b16 %v868, %v867
    %v886 = vpack.c.b16 %v870, %v869
    %v887 = vpack.c.b16 %v872, %v871
    %v888 = vpack.c.b16 %v874, %v873
    %v889 = vpack.c.b16 %v876, %v875
    %v890 = vpack.c.b16 %v877, %v877
    %v904 = vsel %vm486, %v351, 0
    %v907 = vsel %vm99, %v890, 0
    %909 = vmatprep.subr.bf16.mxu0 0
    %910 = vmatpush1.bf16.msra.mxu0 %v878
    %911 = vmatprep.subr.bf16.mxu0 0
    %912 = vmatpush1.bf16.msra.mxu0 %v879
    %913 = vmatprep.subr.bf16.mxu0 0
    %914 = vmatpush1.bf16.msra.mxu0 %v880
    %915 = vmatprep.subr.bf16.mxu0 0
    %916 = vmatpush1.bf16.msra.mxu0 %v881
    %917 = vmatprep.subr.bf16.mxu0 0
    %918 = vmatpush1.bf16.msra.mxu0 %v882
    %919 = vmatprep.subr.bf16.mxu0 0
    %920 = vmatpush1.bf16.msra.mxu0 %v883
    %921 = vmatprep.subr.bf16.mxu0 0
    %922 = vmatpush1.bf16.msra.mxu0 %v884
    %923 = vmatprep.subr.bf16.mxu0 0
    %924 = vmatpush1.bf16.msra.mxu0 %v885
    %925 = vmatprep.subr.bf16.mxu0 0
    %926 = vmatpush1.bf16.msra.mxu0 %v886
    %927 = vmatprep.subr.bf16.mxu0 0
    %928 = vmatpush1.bf16.msra.mxu0 %v887
    %929 = vmatprep.subr.bf16.mxu0 0
    %930 = vmatpush1.bf16.msra.mxu0 %v888
    %931 = vmatprep.subr.bf16.mxu0 0
    %932 = vmatpush1.bf16.msra.mxu0 %v889
    %933 = vmatprep.subr.bf16.mxu0 0
    %934 = vmatpush1.bf16.msra.mxu0 %v907
    %935 = vmatprep.subr.bf16.mxu0 0
    %936 = vmatpush1.bf16.msra.mxu0 0
    %937 = vmatprep.subr.bf16.mxu0 0
    %938 = vmatpush1.bf16.msra.mxu0 0
    %939 = vmatprep.subr.bf16.mxu0 0
    %940 = vmatpush1.bf16.msra.mxu0 0
    %941 = vmatprep.mubr.bf16.mxu0 %v904
    %942 = vmatmul.mubr.bf16.gmra.mrb[0].mxu0 %v350
    %v943 = vpop.f32.mrb[0].mxu0
    %v944 = vadd.f32 0.0, %v943
    %v945 = vpop.f32.mrb[0].mxu0
    %v946 = vpop.f32.mrb[0].mxu0
    %v947 = vpop.f32.mrb[0].mxu0
    %948 = vdwg.mxu0
    %v949 = vadd.f32 %v801, %v944
    %s950 = scalar_lea.vmem %s3, 400
    %v951 = vld [vmem:[%s950] sm:$0xf]
    %v952 = vld [vmem:[%s950 + $0x4] sm:$0xf]
    %v953 = vld [vmem:[%s950 + $0x8] sm:$0xf]
    %v954 = vld [vmem:[%s950 + $0xc] sm:$0xf]
    %v955 = vld [vmem:[%s950 + $0x10] sm:$0xf]
    %v956 = vld [vmem:[%s950 + $0x14] sm:$0xf]
    %v957 = vld [vmem:[%s950 + $0x18] sm:$0xf]
    %v958 = vld [vmem:[%s950 + $0x1c] sm:$0xf]
    %v959 = vld [vmem:[%s950 + $0x20] sm:$0xf]
    %v960 = vld [vmem:[%s950 + $0x24] sm:$0xf]
    %v961 = vld [vmem:[%s950 + $0x28] sm:$0xf]
    %v962 = vld [vmem:[%s950 + $0x2c] sm:$0xf]
    %v963 = vld [vmem:[%s950 + $0x30] sm:$0xf]
    %v964 = vld [vmem:[%s950 + $0x34] sm:$0xf]
    %v965 = vld [vmem:[%s950 + $0x38] sm:$0xf]
    %v966 = vld [vmem:[%s950 + $0x3c] sm:$0xf]
    %v967 = vld [vmem:[%s950 + $0x40] sm:$0xf]
    %v968 = vld [vmem:[%s950 + $0x44] sm:$0xf]
    %v969 = vld [vmem:[%s950 + $0x48] sm:$0xf]
    %v970 = vld [vmem:[%s950 + $0x4c] sm:$0xf]
    %v971 = vld [vmem:[%s950 + $0x50] sm:$0xf]
    %v972 = vld [vmem:[%s950 + $0x54] sm:$0xf]
    %v973 = vld [vmem:[%s950 + $0x58] sm:$0xf]
    %v974 = vld [vmem:[%s950 + $0x5c] sm:$0xf]
    %v975 = vld [vmem:[%s950 + $0x60] sm:$0x3]
    %v1001 = vunpack.c.l.b16 %v951
    %v1002 = vunpack.c.l.b16 %v952
    %v1003 = vunpack.c.l.b16 %v953
    %v1004 = vunpack.c.l.b16 %v954
    %v1005 = vunpack.c.l.b16 %v955
    %v1006 = vunpack.c.l.b16 %v956
    %v1007 = vunpack.c.l.b16 %v957
    %v1008 = vunpack.c.l.b16 %v958
    %v1009 = vunpack.c.l.b16 %v959
    %v1010 = vunpack.c.l.b16 %v960
    %v1011 = vunpack.c.l.b16 %v961
    %v1012 = vunpack.c.l.b16 %v962
    %v1013 = vunpack.c.l.b16 %v963
    %v1014 = vunpack.c.l.b16 %v964
    %v1015 = vunpack.c.l.b16 %v965
    %v1016 = vunpack.c.l.b16 %v966
    %v1017 = vunpack.c.l.b16 %v967
    %v1018 = vunpack.c.l.b16 %v968
    %v1019 = vunpack.c.l.b16 %v969
    %v1020 = vunpack.c.l.b16 %v970
    %v1021 = vunpack.c.l.b16 %v971
    %v1022 = vunpack.c.l.b16 %v972
    %v1023 = vunpack.c.l.b16 %v973
    %v1024 = vunpack.c.l.b16 %v974
    %v1025 = vunpack.c.l.b16 %v975
    %v1026 = vpack.c.b16 %v1002, %v1001
    %v1027 = vpack.c.b16 %v1004, %v1003
    %v1028 = vpack.c.b16 %v1006, %v1005
    %v1029 = vpack.c.b16 %v1008, %v1007
    %v1030 = vpack.c.b16 %v1010, %v1009
    %v1031 = vpack.c.b16 %v1012, %v1011
    %v1032 = vpack.c.b16 %v1014, %v1013
    %v1033 = vpack.c.b16 %v1016, %v1015
    %v1034 = vpack.c.b16 %v1018, %v1017
    %v1035 = vpack.c.b16 %v1020, %v1019
    %v1036 = vpack.c.b16 %v1022, %v1021
    %v1037 = vpack.c.b16 %v1024, %v1023
    %v1038 = vpack.c.b16 %v1025, %v1025
    %v1052 = vsel %vm486, %v353, 0
    %v1055 = vsel %vm99, %v1038, 0
    %1057 = vmatprep.subr.bf16.mxu0 0
    %1058 = vmatpush1.bf16.msra.mxu0 %v1026
    %1059 = vmatprep.subr.bf16.mxu0 0
    %1060 = vmatpush1.bf16.msra.mxu0 %v1027
    %1061 = vmatprep.subr.bf16.mxu0 0
    %1062 = vmatpush1.bf16.msra.mxu0 %v1028
    %1063 = vmatprep.subr.bf16.mxu0 0
    %1064 = vmatpush1.bf16.msra.mxu0 %v1029
    %1065 = vmatprep.subr.bf16.mxu0 0
    %1066 = vmatpush1.bf16.msra.mxu0 %v1030
    %1067 = vmatprep.subr.bf16.mxu0 0
    %1068 = vmatpush1.bf16.msra.mxu0 %v1031
    %1069 = vmatprep.subr.bf16.mxu0 0
    %1070 = vmatpush1.bf16.msra.mxu0 %v1032
    %1071 = vmatprep.subr.bf16.mxu0 0
    %1072 = vmatpush1.bf16.msra.mxu0 %v1033
    %1073 = vmatprep.subr.bf16.mxu0 0
    %1074 = vmatpush1.bf16.msra.mxu0 %v1034
    %1075 = vmatprep.subr.bf16.mxu0 0
    %1076 = vmatpush1.bf16.msra.mxu0 %v1035
    %1077 = vmatprep.subr.bf16.mxu0 0
    %1078 = vmatpush1.bf16.msra.mxu0 %v1036
    %1079 = vmatprep.subr.bf16.mxu0 0
    %1080 = vmatpush1.bf16.msra.mxu0 %v1037
    %1081 = vmatprep.subr.bf16.mxu0 0
    %1082 = vmatpush1.bf16.msra.mxu0 %v1055
    %1083 = vmatprep.subr.bf16.mxu0 0
    %1084 = vmatpush1.bf16.msra.mxu0 0
    %1085 = vmatprep.subr.bf16.mxu0 0
    %1086 = vmatpush1.bf16.msra.mxu0 0
    %1087 = vmatprep.subr.bf16.mxu0 0
    %1088 = vmatpush1.bf16.msra.mxu0 0
    %1089 = vmatprep.mubr.bf16.mxu0 %v1052
    %1090 = vmatmul.mubr.bf16.gmra.mrb[0].mxu0 %v352
    %v1091 = vpop.f32.mrb[0].mxu0
    %v1092 = vadd.f32 0.0, %v1091
    %v1093 = vpop.f32.mrb[0].mxu0
    %v1094 = vpop.f32.mrb[0].mxu0
    %v1095 = vpop.f32.mrb[0].mxu0
    %1096 = vdwg.mxu0
    %v1097 = vadd.f32 %v949, %v1092
    %s1098 = scalar_lea.vmem %s3, 500
    %v1099 = vld [vmem:[%s1098] sm:$0xf]
    %v1100 = vld [vmem:[%s1098 + $0x4] sm:$0xf]
    %v1101 = vld [vmem:[%s1098 + $0x8] sm:$0xf]
    %v1102 = vld [vmem:[%s1098 + $0xc] sm:$0xf]
    %v1103 = vld [vmem:[%s1098 + $0x10] sm:$0xf]
    %v1104 = vld [vmem:[%s1098 + $0x14] sm:$0xf]
    %v1105 = vld [vmem:[%s1098 + $0x18] sm:$0xf]
    %v1106 = vld [vmem:[%s1098 + $0x1c] sm:$0xf]
    %v1107 = vld [vmem:[%s1098 + $0x20] sm:$0xf]
    %v1108 = vld [vmem:[%s1098 + $0x24] sm:$0xf]
    %v1109 = vld [vmem:[%s1098 + $0x28] sm:$0xf]
    %v1110 = vld [vmem:[%s1098 + $0x2c] sm:$0xf]
    %v1111 = vld [vmem:[%s1098 + $0x30] sm:$0xf]
    %v1112 = vld [vmem:[%s1098 + $0x34] sm:$0xf]
    %v1113 = vld [vmem:[%s1098 + $0x38] sm:$0xf]
    %v1114 = vld [vmem:[%s1098 + $0x3c] sm:$0xf]
    %v1115 = vld [vmem:[%s1098 + $0x40] sm:$0xf]
    %v1116 = vld [vmem:[%s1098 + $0x44] sm:$0xf]
    %v1117 = vld [vmem:[%s1098 + $0x48] sm:$0xf]
    %v1118 = vld [vmem:[%s1098 + $0x4c] sm:$0xf]
    %v1119 = vld [vmem:[%s1098 + $0x50] sm:$0xf]
    %v1120 = vld [vmem:[%s1098 + $0x54] sm:$0xf]
    %v1121 = vld [vmem:[%s1098 + $0x58] sm:$0xf]
    %v1122 = vld [vmem:[%s1098 + $0x5c] sm:$0xf]
    %v1123 = vld [vmem:[%s1098 + $0x60] sm:$0x3]
    %v1149 = vunpack.c.l.b16 %v1099
    %v1150 = vunpack.c.l.b16 %v1100
    %v1151 = vunpack.c.l.b16 %v1101
    %v1152 = vunpack.c.l.b16 %v1102
    %v1153 = vunpack.c.l.b16 %v1103
    %v1154 = vunpack.c.l.b16 %v1104
    %v1155 = vunpack.c.l.b16 %v1105
    %v1156 = vunpack.c.l.b16 %v1106
    %v1157 = vunpack.c.l.b16 %v1107
    %v1158 = vunpack.c.l.b16 %v1108
    %v1159 = vunpack.c.l.b16 %v1109
    %v1160 = vunpack.c.l.b16 %v1110
    %v1161 = vunpack.c.l.b16 %v1111
    %v1162 = vunpack.c.l.b16 %v1112
    %v1163 = vunpack.c.l.b16 %v1113
    %v1164 = vunpack.c.l.b16 %v1114
    %v1165 = vunpack.c.l.b16 %v1115
    %v1166 = vunpack.c.l.b16 %v1116
    %v1167 = vunpack.c.l.b16 %v1117
    %v1168 = vunpack.c.l.b16 %v1118
    %v1169 = vunpack.c.l.b16 %v1119
    %v1170 = vunpack.c.l.b16 %v1120
    %v1171 = vunpack.c.l.b16 %v1121
    %v1172 = vunpack.c.l.b16 %v1122
    %v1173 = vunpack.c.l.b16 %v1123
    %v1174 = vpack.c.b16 %v1150, %v1149
    %v1175 = vpack.c.b16 %v1152, %v1151
    %v1176 = vpack.c.b16 %v1154, %v1153
    %v1177 = vpack.c.b16 %v1156, %v1155
    %v1178 = vpack.c.b16 %v1158, %v1157
    %v1179 = vpack.c.b16 %v1160, %v1159
    %v1180 = vpack.c.b16 %v1162, %v1161
    %v1181 = vpack.c.b16 %v1164, %v1163
    %v1182 = vpack.c.b16 %v1166, %v1165
    %v1183 = vpack.c.b16 %v1168, %v1167
    %v1184 = vpack.c.b16 %v1170, %v1169
    %v1185 = vpack.c.b16 %v1172, %v1171
    %v1186 = vpack.c.b16 %v1173, %v1173
    %v1200 = vsel %vm486, %v355, 0
    %v1203 = vsel %vm99, %v1186, 0
    %1205 = vmatprep.subr.bf16.mxu0 0
    %1206 = vmatpush1.bf16.msra.mxu0 %v1174
    %1207 = vmatprep.subr.bf16.mxu0 0
    %1208 = vmatpush1.bf16.msra.mxu0 %v1175
    %1209 = vmatprep.subr.bf16.mxu0 0
    %1210 = vmatpush1.bf16.msra.mxu0 %v1176
    %1211 = vmatprep.subr.bf16.mxu0 0
    %1212 = vmatpush1.bf16.msra.mxu0 %v1177
    %1213 = vmatprep.subr.bf16.mxu0 0
    %1214 = vmatpush1.bf16.msra.mxu0 %v1178
    %1215 = vmatprep.subr.bf16.mxu0 0
    %1216 = vmatpush1.bf16.msra.mxu0 %v1179
    %1217 = vmatprep.subr.bf16.mxu0 0
    %1218 = vmatpush1.bf16.msra.mxu0 %v1180
    %1219 = vmatprep.subr.bf16.mxu0 0
    %1220 = vmatpush1.bf16.msra.mxu0 %v1181
    %1221 = vmatprep.subr.bf16.mxu0 0
    %1222 = vmatpush1.bf16.msra.mxu0 %v1182
    %1223 = vmatprep.subr.bf16.mxu0 0
    %1224 = vmatpush1.bf16.msra.mxu0 %v1183
    %1225 = vmatprep.subr.bf16.mxu0 0
    %1226 = vmatpush1.bf16.msra.mxu0 %v1184
    %1227 = vmatprep.subr.bf16.mxu0 0
    %1228 = vmatpush1.bf16.msra.mxu0 %v1185
    %1229 = vmatprep.subr.bf16.mxu0 0
    %1230 = vmatpush1.bf16.msra.mxu0 %v1203
    %1231 = vmatprep.subr.bf16.mxu0 0
    %1232 = vmatpush1.bf16.msra.mxu0 0
    %1233 = vmatprep.subr.bf16.mxu0 0
    %1234 = vmatpush1.bf16.msra.mxu0 0
    %1235 = vmatprep.subr.bf16.mxu0 0
    %1236 = vmatpush1.bf16.msra.mxu0 0
    %1237 = vmatprep.mubr.bf16.mxu0 %v1200
    %1238 = vmatmul.mubr.bf16.gmra.mrb[0].mxu0 %v354
    %v1239 = vpop.f32.mrb[0].mxu0
    %v1240 = vadd.f32 0.0, %v1239
    %v1241 = vpop.f32.mrb[0].mxu0
    %v1242 = vpop.f32.mrb[0].mxu0
    %v1243 = vpop.f32.mrb[0].mxu0
    %1244 = vdwg.mxu0
    %v1245 = vadd.f32 %v1097, %v1240
    %s1246 = scalar_lea.vmem %s3, 600
    %v1247 = vld [vmem:[%s1246] sm:$0xf]
    %v1248 = vld [vmem:[%s1246 + $0x4] sm:$0xf]
    %v1249 = vld [vmem:[%s1246 + $0x8] sm:$0xf]
    %v1250 = vld [vmem:[%s1246 + $0xc] sm:$0xf]
    %v1251 = vld [vmem:[%s1246 + $0x10] sm:$0xf]
    %v1252 = vld [vmem:[%s1246 + $0x14] sm:$0xf]
    %v1253 = vld [vmem:[%s1246 + $0x18] sm:$0xf]
    %v1254 = vld [vmem:[%s1246 + $0x1c] sm:$0xf]
    %v1255 = vld [vmem:[%s1246 + $0x20] sm:$0xf]
    %v1256 = vld [vmem:[%s1246 + $0x24] sm:$0xf]
    %v1257 = vld [vmem:[%s1246 + $0x28] sm:$0xf]
    %v1258 = vld [vmem:[%s1246 + $0x2c] sm:$0xf]
    %v1259 = vld [vmem:[%s1246 + $0x30] sm:$0xf]
    %v1260 = vld [vmem:[%s1246 + $0x34] sm:$0xf]
    %v1261 = vld [vmem:[%s1246 + $0x38] sm:$0xf]
    %v1262 = vld [vmem:[%s1246 + $0x3c] sm:$0xf]
    %v1263 = vld [vmem:[%s1246 + $0x40] sm:$0xf]
    %v1264 = vld [vmem:[%s1246 + $0x44] sm:$0xf]
    %v1265 = vld [vmem:[%s1246 + $0x48] sm:$0xf]
    %v1266 = vld [vmem:[%s1246 + $0x4c] sm:$0xf]
    %v1267 = vld [vmem:[%s1246 + $0x50] sm:$0xf]
    %v1268 = vld [vmem:[%s1246 + $0x54] sm:$0xf]
    %v1269 = vld [vmem:[%s1246 + $0x58] sm:$0xf]
    %v1270 = vld [vmem:[%s1246 + $0x5c] sm:$0xf]
    %v1271 = vld [vmem:[%s1246 + $0x60] sm:$0x3]
    %v1297 = vunpack.c.l.b16 %v1247
    %v1298 = vunpack.c.l.b16 %v1248
    %v1299 = vunpack.c.l.b16 %v1249
    %v1300 = vunpack.c.l.b16 %v1250
    %v1301 = vunpack.c.l.b16 %v1251
    %v1302 = vunpack.c.l.b16 %v1252
    %v1303 = vunpack.c.l.b16 %v1253
    %v1304 = vunpack.c.l.b16 %v1254
    %v1305 = vunpack.c.l.b16 %v1255
    %v1306 = vunpack.c.l.b16 %v1256
    %v1307 = vunpack.c.l.b16 %v1257
    %v1308 = vunpack.c.l.b16 %v1258
    %v1309 = vunpack.c.l.b16 %v1259
    %v1310 = vunpack.c.l.b16 %v1260
    %v1311 = vunpack.c.l.b16 %v1261
    %v1312 = vunpack.c.l.b16 %v1262
    %v1313 = vunpack.c.l.b16 %v1263
    %v1314 = vunpack.c.l.b16 %v1264
    %v1315 = vunpack.c.l.b16 %v1265
    %v1316 = vunpack.c.l.b16 %v1266
    %v1317 = vunpack.c.l.b16 %v1267
    %v1318 = vunpack.c.l.b16 %v1268
    %v1319 = vunpack.c.l.b16 %v1269
    %v1320 = vunpack.c.l.b16 %v1270
    %v1321 = vunpack.c.l.b16 %v1271
    %v1322 = vpack.c.b16 %v1298, %v1297
    %v1323 = vpack.c.b16 %v1300, %v1299
    %v1324 = vpack.c.b16 %v1302, %v1301
    %v1325 = vpack.c.b16 %v1304, %v1303
    %v1326 = vpack.c.b16 %v1306, %v1305
    %v1327 = vpack.c.b16 %v1308, %v1307
    %v1328 = vpack.c.b16 %v1310, %v1309
    %v1329 = vpack.c.b16 %v1312, %v1311
    %v1330 = vpack.c.b16 %v1314, %v1313
    %v1331 = vpack.c.b16 %v1316, %v1315
    %v1332 = vpack.c.b16 %v1318, %v1317
    %v1333 = vpack.c.b16 %v1320, %v1319
    %v1334 = vpack.c.b16 %v1321, %v1321
    %v1348 = vsel %vm486, %v357, 0
    %v1351 = vsel %vm99, %v1334, 0
    %1353 = vmatprep.subr.bf16.mxu0 0
    %1354 = vmatpush1.bf16.msra.mxu0 %v1322
    %1355 = vmatprep.subr.bf16.mxu0 0
    %1356 = vmatpush1.bf16.msra.mxu0 %v1323
    %1357 = vmatprep.subr.bf16.mxu0 0
    %1358 = vmatpush1.bf16.msra.mxu0 %v1324
    %1359 = vmatprep.subr.bf16.mxu0 0
    %1360 = vmatpush1.bf16.msra.mxu0 %v1325
    %1361 = vmatprep.subr.bf16.mxu0 0
    %1362 = vmatpush1.bf16.msra.mxu0 %v1326
    %1363 = vmatprep.subr.bf16.mxu0 0
    %1364 = vmatpush1.bf16.msra.mxu0 %v1327
    %1365 = vmatprep.subr.bf16.mxu0 0
    %1366 = vmatpush1.bf16.msra.mxu0 %v1328
    %1367 = vmatprep.subr.bf16.mxu0 0
    %1368 = vmatpush1.bf16.msra.mxu0 %v1329
    %1369 = vmatprep.subr.bf16.mxu0 0
    %1370 = vmatpush1.bf16.msra.mxu0 %v1330
    %1371 = vmatprep.subr.bf16.mxu0 0
    %1372 = vmatpush1.bf16.msra.mxu0 %v1331
    %1373 = vmatprep.subr.bf16.mxu0 0
    %1374 = vmatpush1.bf16.msra.mxu0 %v1332
    %1375 = vmatprep.subr.bf16.mxu0 0
    %1376 = vmatpush1.bf16.msra.mxu0 %v1333
    %1377 = vmatprep.subr.bf16.mxu0 0
    %1378 = vmatpush1.bf16.msra.mxu0 %v1351
    %1379 = vmatprep.subr.bf16.mxu0 0
    %1380 = vmatpush1.bf16.msra.mxu0 0
    %1381 = vmatprep.subr.bf16.mxu0 0
    %1382 = vmatpush1.bf16.msra.mxu0 0
    %1383 = vmatprep.subr.bf16.mxu0 0
    %1384 = vmatpush1.bf16.msra.mxu0 0
    %1385 = vmatprep.mubr.bf16.mxu0 %v1348
    %1386 = vmatmul.mubr.bf16.gmra.mrb[0].mxu0 %v356
    %v1387 = vpop.f32.mrb[0].mxu0
    %v1388 = vadd.f32 0.0, %v1387
    %v1389 = vpop.f32.mrb[0].mxu0
    %v1390 = vpop.f32.mrb[0].mxu0
    %v1391 = vpop.f32.mrb[0].mxu0
    %1392 = vdwg.mxu0
    %v1393 = vadd.f32 %v1245, %v1388
    %s1394 = scalar_lea.vmem %s3, 700
    %v1395 = vld [vmem:[%s1394] sm:$0xf]
    %v1396 = vld [vmem:[%s1394 + $0x4] sm:$0xf]
    %v1397 = vld [vmem:[%s1394 + $0x8] sm:$0xf]
    %v1398 = vld [vmem:[%s1394 + $0xc] sm:$0xf]
    %v1399 = vld [vmem:[%s1394 + $0x10] sm:$0xf]
    %v1400 = vld [vmem:[%s1394 + $0x14] sm:$0xf]
    %v1401 = vld [vmem:[%s1394 + $0x18] sm:$0xf]
    %v1402 = vld [vmem:[%s1394 + $0x1c] sm:$0xf]
    %v1403 = vld [vmem:[%s1394 + $0x20] sm:$0xf]
    %v1404 = vld [vmem:[%s1394 + $0x24] sm:$0xf]
    %v1405 = vld [vmem:[%s1394 + $0x28] sm:$0xf]
    %v1406 = vld [vmem:[%s1394 + $0x2c] sm:$0xf]
    %v1407 = vld [vmem:[%s1394 + $0x30] sm:$0xf]
    %v1408 = vld [vmem:[%s1394 + $0x34] sm:$0xf]
    %v1409 = vld [vmem:[%s1394 + $0x38] sm:$0xf]
    %v1410 = vld [vmem:[%s1394 + $0x3c] sm:$0xf]
    %v1411 = vld [vmem:[%s1394 + $0x40] sm:$0xf]
    %v1412 = vld [vmem:[%s1394 + $0x44] sm:$0xf]
    %v1413 = vld [vmem:[%s1394 + $0x48] sm:$0xf]
    %v1414 = vld [vmem:[%s1394 + $0x4c] sm:$0xf]
    %v1415 = vld [vmem:[%s1394 + $0x50] sm:$0xf]
    %v1416 = vld [vmem:[%s1394 + $0x54] sm:$0xf]
    %v1417 = vld [vmem:[%s1394 + $0x58] sm:$0xf]
    %v1418 = vld [vmem:[%s1394 + $0x5c] sm:$0xf]
    %v1419 = vld [vmem:[%s1394 + $0x60] sm:$0x3]
    %v1445 = vunpack.c.l.b16 %v1395
    %v1446 = vunpack.c.l.b16 %v1396
    %v1447 = vunpack.c.l.b16 %v1397
    %v1448 = vunpack.c.l.b16 %v1398
    %v1449 = vunpack.c.l.b16 %v1399
    %v1450 = vunpack.c.l.b16 %v1400
    %v1451 = vunpack.c.l.b16 %v1401
    %v1452 = vunpack.c.l.b16 %v1402
    %v1453 = vunpack.c.l.b16 %v1403
    %v1454 = vunpack.c.l.b16 %v1404
    %v1455 = vunpack.c.l.b16 %v1405
    %v1456 = vunpack.c.l.b16 %v1406
    %v1457 = vunpack.c.l.b16 %v1407
    %v1458 = vunpack.c.l.b16 %v1408
    %v1459 = vunpack.c.l.b16 %v1409
    %v1460 = vunpack.c.l.b16 %v1410
    %v1461 = vunpack.c.l.b16 %v1411
    %v1462 = vunpack.c.l.b16 %v1412
    %v1463 = vunpack.c.l.b16 %v1413
    %v1464 = vunpack.c.l.b16 %v1414
    %v1465 = vunpack.c.l.b16 %v1415
    %v1466 = vunpack.c.l.b16 %v1416
    %v1467 = vunpack.c.l.b16 %v1417
    %v1468 = vunpack.c.l.b16 %v1418
    %v1469 = vunpack.c.l.b16 %v1419
    %v1470 = vpack.c.b16 %v1446, %v1445
    %v1471 = vpack.c.b16 %v1448, %v1447
    %v1472 = vpack.c.b16 %v1450, %v1449
    %v1473 = vpack.c.b16 %v1452, %v1451
    %v1474 = vpack.c.b16 %v1454, %v1453
    %v1475 = vpack.c.b16 %v1456, %v1455
    %v1476 = vpack.c.b16 %v1458, %v1457
    %v1477 = vpack.c.b16 %v1460, %v1459
    %v1478 = vpack.c.b16 %v1462, %v1461
    %v1479 = vpack.c.b16 %v1464, %v1463
    %v1480 = vpack.c.b16 %v1466, %v1465
    %v1481 = vpack.c.b16 %v1468, %v1467
    %v1482 = vpack.c.b16 %v1469, %v1469
    %v1496 = vsel %vm486, %v359, 0
    %v1499 = vsel %vm99, %v1482, 0
    %1501 = vmatprep.subr.bf16.mxu0 0
    %1502 = vmatpush1.bf16.msra.mxu0 %v1470
    %1503 = vmatprep.subr.bf16.mxu0 0
    %1504 = vmatpush1.bf16.msra.mxu0 %v1471
    %1505 = vmatprep.subr.bf16.mxu0 0
    %1506 = vmatpush1.bf16.msra.mxu0 %v1472
    %1507 = vmatprep.subr.bf16.mxu0 0
    %1508 = vmatpush1.bf16.msra.mxu0 %v1473
    %1509 = vmatprep.subr.bf16.mxu0 0
    %1510 = vmatpush1.bf16.msra.mxu0 %v1474
    %1511 = vmatprep.subr.bf16.mxu0 0
    %1512 = vmatpush1.bf16.msra.mxu0 %v1475
    %1513 = vmatprep.subr.bf16.mxu0 0
    %1514 = vmatpush1.bf16.msra.mxu0 %v1476
    %1515 = vmatprep.subr.bf16.mxu0 0
    %1516 = vmatpush1.bf16.msra.mxu0 %v1477
    %1517 = vmatprep.subr.bf16.mxu0 0
    %1518 = vmatpush1.bf16.msra.mxu0 %v1478
    %1519 = vmatprep.subr.bf16.mxu0 0
    %1520 = vmatpush1.bf16.msra.mxu0 %v1479
    %1521 = vmatprep.subr.bf16.mxu0 0
    %1522 = vmatpush1.bf16.msra.mxu0 %v1480
    %1523 = vmatprep.subr.bf16.mxu0 0
    %1524 = vmatpush1.bf16.msra.mxu0 %v1481
    %1525 = vmatprep.subr.bf16.mxu0 0
    %1526 = vmatpush1.bf16.msra.mxu0 %v1499
    %1527 = vmatprep.subr.bf16.mxu0 0
    %1528 = vmatpush1.bf16.msra.mxu0 0
    %1529 = vmatprep.subr.bf16.mxu0 0
    %1530 = vmatpush1.bf16.msra.mxu0 0
    %1531 = vmatprep.subr.bf16.mxu0 0
    %1532 = vmatpush1.bf16.msra.mxu0 0
    %1533 = vmatprep.mubr.bf16.mxu0 %v1496
    %1534 = vmatmul.mubr.bf16.gmra.mrb[0].mxu0 %v358
    %v1535 = vpop.f32.mrb[0].mxu0
    %v1536 = vadd.f32 0.0, %v1535
    %v1537 = vpop.f32.mrb[0].mxu0
    %v1538 = vpop.f32.mrb[0].mxu0
    %v1539 = vpop.f32.mrb[0].mxu0
    %1540 = vdwg.mxu0
    %v1541 = vadd.f32 %v1393, %v1536
    %v1542 = vld [vmem:[%s4] sm:$0x1]
    %v1544 = vlaneseq
    %v1545 = vshrl.u32 %v1544, 7
    %v1546 = vsub.s32 0, %v1545
    %v1547 = vrot.slane %v1542, %v1546
    %v1549 = vadd.f32 %v1541, %v1547
    %v1550 = vmax.f32 %v1549, 0.0
    %v1551 = vpack.c.bf16 %v1550, %v1550
    %v1552 = vld [vmem:[%s5] sm:$0xf]
    %v1553 = vld [vmem:[%s5 + $0x4] sm:$0xf]
    %v1554 = vld [vmem:[%s5 + $0x8] sm:$0xf]
    %v1555 = vld [vmem:[%s5 + $0xc] sm:$0xf]
    %v1556 = vld [vmem:[%s6] sm:$0x1]
    %v1558 = vlaneseq
    %v1559 = vshrl.u32 %v1558, 7
    %v1560 = vsub.s32 0, %v1559
    %v1561 = vrot.slane %v1556, %v1560
    %v1567 = vunpack.c.l.b16 %v1552
    %v1568 = vunpack.c.l.b16 %v1553
    %v1569 = vunpack.c.l.b16 %v1554
    %v1570 = vunpack.c.l.b16 %v1555
    %v1571 = vpack.c.b16 %v1568, %v1567
    %v1572 = vpack.c.b16 %v1570, %v1569
    %vm1575 = vcmask 261120
    %v1577 = vsel %vm1575, %v1551, 0
    %1579 = vmatprep.subr.bf16.mxu0 0
    %1580 = vmatpush1.bf16.msra.mxu0 %v1571
    %1581 = vmatprep.subr.bf16.mxu0 0
    %1582 = vmatpush1.bf16.msra.mxu0 %v1572
    %1583 = vmatprep.subr.bf16.mxu0 0
    %1584 = vmatpush1.bf16.msra.mxu0 0
    %1585 = vmatprep.subr.bf16.mxu0 0
    %1586 = vmatpush1.bf16.msra.mxu0 0
    %1587 = vmatprep.subr.bf16.mxu0 0
    %1588 = vmatpush1.bf16.msra.mxu0 0
    %1589 = vmatprep.subr.bf16.mxu0 0
    %1590 = vmatpush1.bf16.msra.mxu0 0
    %1591 = vmatprep.subr.bf16.mxu0 0
    %1592 = vmatpush1.bf16.msra.mxu0 0
    %1593 = vmatprep.subr.bf16.mxu0 0
    %1594 = vmatpush1.bf16.msra.mxu0 0
    %1595 = vmatprep.subr.bf16.mxu0 0
    %1596 = vmatpush1.bf16.msra.mxu0 0
    %1597 = vmatprep.subr.bf16.mxu0 0
    %1598 = vmatpush1.bf16.msra.mxu0 0
    %1599 = vmatprep.subr.bf16.mxu0 0
    %1600 = vmatpush1.bf16.msra.mxu0 0
    %1601 = vmatprep.subr.bf16.mxu0 0
    %1602 = vmatpush1.bf16.msra.mxu0 0
    %1603 = vmatprep.subr.bf16.mxu0 0
    %1604 = vmatpush1.bf16.msra.mxu0 0
    %1605 = vmatprep.subr.bf16.mxu0 0
    %1606 = vmatpush1.bf16.msra.mxu0 0
    %1607 = vmatprep.subr.bf16.mxu0 0
    %1608 = vmatpush1.bf16.msra.mxu0 0
    %1609 = vmatprep.subr.bf16.mxu0 0
    %1610 = vmatpush1.bf16.msra.mxu0 0
    %1611 = vmatprep.mubr.bf16.mxu0 0
    %1612 = vmatmul.mubr.bf16.gmra.mrb[0].mxu0 %v1577
    %v1613 = vpop.f32.mrb[0].mxu0
    %v1614 = vadd.f32 %v1561, %v1613
    %v1615 = vpop.f32.mrb[0].mxu0
    %v1616 = vpop.f32.mrb[0].mxu0
    %v1617 = vpop.f32.mrb[0].mxu0
    %1618 = vdwg.mxu0
    %vm1619 = vcmask 25600
    %1620 = vst.msk [vmem:[#allocation2] sm:$0x3] %vm1619, %v1614
    // Predicated region
    $region30: #{dqn_forward.1} parent=1 // pred_check
      _
    $region31: #{dqn_forward.1} parent=1 // pred_check_branch
      %1622 = sbr.rel (0) target = $region33
    $region32: #{dqn_forward.1} parent=1 // pred_region
      %s1624 = ssub.s32 32, 32
      %1625 = vsyncadd [#allocation3], %s1624
      %s1627 = sshll.u32 [#allocation2], 4
      %s1628 = int_to_ptr.vmem [resolvable:$true] %s1627
      %1630 = dma.vmem_to_hbm [thread:$0]  %s1628, 32, %s7, [#allocation3]
    $region33: #{dqn_forward.1} parent=1 // pred_fallthru
      _
    // Predicated region
    $region34: #{dqn_forward.1} parent=1 // pred_check
      _
    $region35: #{dqn_forward.1} parent=1 // pred_check_branch
      %1632 = sbr.rel (0) target = $region37
    $region36: #{dqn_forward.1} parent=1 // pred_region
      %1633 = dma.done [#allocation3], 32
    $region37: #{dqn_forward.1} parent=1 // pred_fallthru
      _
    %1634 = vsyncpa [#allocation3], 1

</llo_original>
